<compile_context>
chip_gen: v7x
topology: tpu7x:2x2x1
jax: 0.10.0
libtpu: 0.0.40
codegen_flags: <defaults>
</compile_context>

<pallas_src>
import functools

import jax
import jax.numpy as jnp
from jax import lax
from jax.experimental import pallas as pl
from jax.experimental.pallas import tpu as pltpu

BN_EPS = 1e-5


def _round_up(x, m):
    return ((x + m - 1) // m) * m


def _vmem_limit_bytes():
    """Scoped-VMEM limit derived from the local chip (96 MiB on 128-MiB parts, 48 MiB on v7x)."""
    try:
        cap = int(pltpu.get_tpu_info().vmem_capacity_bytes)
    except Exception:
        cap = 64 * 1024 * 1024          # conservative fallback: v7x physical size
    return min((cap * 3) // 4, 100 * 1024 * 1024)


_VMEM_LIMIT = _vmem_limit_bytes()


def _pick_tile(m, block_rows, align=256):
    """Row-tile size: multiple of 256 (full MXU passes, 128-aligned for v5e) and at least two
    tiles whenever M allows, so v7x's second TensorCore gets work."""
    target = max(1, min(block_rows, pl.cdiv(m, 2)))
    tm = _round_up(target, align)
    return min(tm, _round_up(m, align))


# ---------------------------------------------------------------------------
# Pallas kernels
# ---------------------------------------------------------------------------

def _conv_stats_kernel(p_ref, w_ref, y_ref, st_ref):
    """One MXU matmul per row tile + per-tile BatchNorm partial statistics.

    p_ref : [tm, K]    bf16  K-folded patch rows (all taps folded into the contraction)
    w_ref : [K, 128p]  bf16  lane-dense (zero-padded) weight matrix, resident across the grid
    y_ref : [tm, 128p] bf16  pre-BN conv output tile
    st_ref: [8, 128p]  f32   row 0 = per-lane sum, row 1 = per-lane sum of squares
    """
    acc = jnp.dot(p_ref[...], w_ref[...], preferred_element_type=jnp.float32)
    y_ref[...] = acc.astype(y_ref.dtype)
    st_ref[0:1, :] = jnp.sum(acc, axis=0, keepdims=True)
    st_ref[1:2, :] = jnp.sum(acc * acc, axis=0, keepdims=True)
    # rows 2..7 of st_ref are never read host-side.


def _conv2_stats_kernel(px_ref, pe_ref, wx_ref, we_ref, y_ref, st_ref):
    """Second conv with the channel concat fused: two dots into one f32 accumulator."""
    acc = jnp.dot(px_ref[...], wx_ref[...], preferred_element_type=jnp.float32)
    acc = acc + jnp.dot(pe_ref[...], we_ref[...], preferred_element_type=jnp.float32)
    y_ref[...] = acc.astype(y_ref.dtype)
    st_ref[0:1, :] = jnp.sum(acc, axis=0, keepdims=True)
    st_ref[1:2, :] = jnp.sum(acc * acc, axis=0, keepdims=True)


def _bn_prelu_kernel(y_ref, sp_ref, o_ref):
    """BatchNorm affine + PReLU on a lane-dense [rows, 128p] view (bf16 I/O, f32 math).

    sp_ref rows: 0 = scale, 1 = shift, 2 = PReLU slope (per-lane; supports per-channel slopes).
    """
    y = y_ref[...].astype(jnp.float32)
    z = y * sp_ref[0:1, :] + sp_ref[1:2, :]
    o_ref[...] = jnp.where(z >= 0.0, z, sp_ref[2:3, :] * z).astype(o_ref.dtype)


# ---------------------------------------------------------------------------
# Pallas wrappers
# ---------------------------------------------------------------------------

def _conv_bn_stats(patches, w, block_rows):
    m, kdim = patches.shape
    c = w.shape[1]
    tm = _pick_tile(m, block_rows)
    mp = _round_up(m, tm)
    if mp != m:
        # Zero rows give zero conv output -> contribute 0 to both sum and sumsq (stat-safe).
        patches = jnp.pad(patches, ((0, mp - m), (0, 0)))
    nt = mp // tm
    # TODO(synk): pipeline_mode=pl.Buffered(3) on the patch input if profiling shows exposed DMA.
    y, st = pl.pallas_call(
        _conv_stats_kernel,
        grid=(nt,),
        in_specs=[pl.BlockSpec((tm, kdim), lambda i: (i, 0)),
                  pl.BlockSpec((kdim, c), lambda i: (0, 0))],
        out_specs=(pl.BlockSpec((tm, c), lambda i: (i, 0)),
                   pl.BlockSpec((8, c), lambda i: (i, 0))),
        out_shape=(jax.ShapeDtypeStruct((mp, c), jnp.bfloat16),
                   jax.ShapeDtypeStruct((nt * 8, c), jnp.float32)),
        compiler_params=pltpu.CompilerParams(
            dimension_semantics=("parallel",),
            vmem_limit_bytes=_VMEM_LIMIT),
    )(patches, w)
    st = st.reshape(nt, 8, c)
    return y[:m], st[:, 0, :].sum(axis=0), st[:, 1, :].sum(axis=0)


def _conv2_bn_stats(px, pe, wx, we, block_rows):
    m, kx = px.shape
    ke = pe.shape[1]
    c = wx.shape[1]
    tm = _pick_tile(m, block_rows)
    mp = _round_up(m, tm)
    if mp != m:
        px = jnp.pad(px, ((0, mp - m), (0, 0)))
        pe = jnp.pad(pe, ((0, mp - m), (0, 0)))
    nt = mp // tm
    y, st = pl.pallas_call(
        _conv2_stats_kernel,
        grid=(nt,),
        in_specs=[pl.BlockSpec((tm, kx), lambda i: (i, 0)),
                  pl.BlockSpec((tm, ke), lambda i: (i, 0)),
                  pl.BlockSpec((kx, c), lambda i: (0, 0)),
                  pl.BlockSpec((ke, c), lambda i: (0, 0))],
        out_specs=(pl.BlockSpec((tm, c), lambda i: (i, 0)),
                   pl.BlockSpec((8, c), lambda i: (i, 0))),
        out_shape=(jax.ShapeDtypeStruct((mp, c), jnp.bfloat16),
                   jax.ShapeDtypeStruct((nt * 8, c), jnp.float32)),
        compiler_params=pltpu.CompilerParams(
            dimension_semantics=("parallel",),
            vmem_limit_bytes=_VMEM_LIMIT),
    )(px, pe, wx, we)
    st = st.reshape(nt, 8, c)
    return y[:m], st[:, 0, :].sum(axis=0), st[:, 1, :].sum(axis=0)


def _bn_prelu_apply(y2d, sp, block_rows, out_dtype):
    """Apply BN affine + PReLU on a lane-dense [M, 128p] activation."""
    m, lanes = y2d.shape
    tr = _pick_tile(m, block_rows)
    mp = _round_up(m, tr)
    if mp != m:
        y2d = jnp.pad(y2d, ((0, mp - m), (0, 0)))
    out = pl.pallas_call(
        _bn_prelu_kernel,
        grid=(mp // tr,),
        in_specs=[pl.BlockSpec((tr, lanes), lambda i: (i, 0)),
                  pl.BlockSpec((8, lanes), lambda i: (0, 0))],
        out_specs=pl.BlockSpec((tr, lanes), lambda i: (i, 0)),
        out_shape=jax.ShapeDtypeStruct((mp, lanes), out_dtype),
        compiler_params=pltpu.CompilerParams(
            dimension_semantics=("parallel",),
            vmem_limit_bytes=_VMEM_LIMIT),
    )(y2d, sp)
    return out[:m]


def _bn_scale_shift(total_sum, total_sq, count, gamma, beta):
    # NOTE: E[x^2]-E[x]^2 with a clamp; activations here are O(1) so cancellation is benign.
    # A centered second pass would be needed if |mean| >> std.
    mean = total_sum / count
    var = jnp.maximum(total_sq / count - mean * mean, 0.0)   # biased variance (training mode)
    scale = gamma * lax.rsqrt(var + BN_EPS)
    return scale, beta - mean * scale


def _lane_params(scale, shift, alpha, lanes):
    """Pack per-channel scale/shift/PReLU-slope into an (8, lanes) lane-dense param block."""
    k = scale.shape[0]
    sp = jnp.zeros((8, lanes), jnp.float32)
    return sp.at[0, :k].set(scale).at[1, :k].set(shift).at[2, :k].set(alpha)


# ---------------------------------------------------------------------------
# Parameter prep / forward
# ---------------------------------------------------------------------------

def prepare_params(params):
    """One-time weight reorganisation, kept out of the jitted hot path.

    Conv biases are intentionally dropped: a bias added before training-mode BatchNorm cancels
    exactly when the batch mean is subtracted, so it has no effect on the forward output.
    """
    wt = params["transp_w"]                      # [Cin, Ct, k, k]  (PyTorch ConvTranspose2d)
    kt = int(wt.shape[2])
    pt = kt // 2
    if kt != 3:
        # stride=2 and output_padding=padding=k//2 -> only k=3 gives an exact 2x upsample here.
        # TODO(synk): generalise the sub-pixel path to other kernel sizes.
        raise NotImplementedError("sub-pixel transposed-conv path assumes kernel=3, stride=2")
    cin, ct = int(wt.shape[0]), int(wt.shape[1])
    cp1 = _round_up(4 * ct, 128)                 # lane-dense output width (4 phase blocks)

    # Fused 4-phase weight: rows = 2x2 low-res window taps (dy,dx) x Cin,
    # cols = [phase(0,0) Ct | phase(0,1) | phase(1,0) | phase(1,1) | 0-pad to 128].
    w1 = jnp.zeros((4 * cin, cp1), jnp.float32)
    for ti, (dy, dx) in enumerate(((0, 0), (0, 1), (1, 0), (1, 1))):
        for a in range(2):
            ky = a + pt - 2 * dy
            if not 0 <= ky < kt:
                continue
            for b in range(2):
                kx = b + pt - 2 * dx
                if not 0 <= kx < kt:
                    continue
                ph = 2 * a + b
                w1 = w1.at[ti * cin:(ti + 1) * cin,
                           ph * ct:(ph + 1) * ct].set(wt[:, :, ky, kx])

    wc = params["conv_w"]                        # [Cout, Ct+Ce, k, k]  (PyTorch Conv2d)
    kc = int(wc.shape[2])
    pc = kc // 2
    cout, cin2 = int(wc.shape[0]), int(wc.shape[1])
    ce = cin2 - ct
    cp2 = _round_up(cout, 128)
    # Split rows: x-part (first Ct input channels) and encoding-part; zero-pad cols to 128 lanes.
    wx = jnp.transpose(wc[:, :ct], (2, 3, 1, 0)).reshape(kc * kc * ct, cout)
    we = jnp.transpose(wc[:, ct:], (2, 3, 1, 0)).reshape(kc * kc * ce, cout)
    wx = jnp.pad(wx, ((0, 0), (0, cp2 - cout)))
    we = jnp.pad(we, ((0, 0), (0, cp2 - cout)))

    prep = {
        "w1": w1.astype(jnp.bfloat16),
        "wx": wx.astype(jnp.bfloat16),
        "we": we.astype(jnp.bfloat16),
        "transp_gamma": params["transp_gamma"].astype(jnp.float32),
        "transp_beta": params["transp_beta"].astype(jnp.float32),
        "transp_alpha": jnp.asarray(params["transp_alpha"], jnp.float32),
        "conv_gamma": params["conv_gamma"].astype(jnp.float32),
        "conv_beta": params["conv_beta"].astype(jnp.float32),
        "conv_alpha": jnp.asarray(params["conv_alpha"], jnp.float32),
    }
    meta = {"cin": cin, "ct": ct, "ce": ce, "cout": cout,
            "cp1": cp1, "cp2": cp2, "kc": kc, "pc": pc}
    return prep, meta


def deconv_block_forward(prep, encoding_nchw, decoding_nchw, *, meta, block_rows=2048):
    """DeconvBlock forward. `block_rows` is the M-tile target of the Pallas grids; tiles are
    further rounded to 256 and clamped so each grid has >=2 steps (v7x dual-TensorCore)."""
    # Public API mirrors PyTorch NCHW; everything internal is NHWC.
    # TODO(synk): a fully-NHWC caller could drop these boundary transposes entirely.
    enc = jnp.transpose(encoding_nchw, (0, 2, 3, 1)).astype(jnp.bfloat16)
    dec = jnp.transpose(decoding_nchw, (0, 2, 3, 1)).astype(jnp.bfloat16)
    n, h, w, cin = dec.shape
    h2, w2 = 2 * h, 2 * w
    ct, ce, cout = meta["ct"], meta["ce"], meta["cout"]
    cp1, cp2 = meta["cp1"], meta["cp2"]
    kc, pc = meta["kc"], meta["pc"]
    m1 = n * h * w

    # ---- TransposeConvBnPRelu (stride 2): all 4 sub-pixel phases fused into ONE matmul ----
    # Low-res 2x2-window patches; each phase's contributing taps live in the fused weight.
    decp = jnp.pad(dec, ((0, 0), (0, 1), (0, 1), (0, 0)))
    p1 = jnp.concatenate(
        [decp[:, dy:dy + h, dx:dx + w, :] for dy in (0, 1) for dx in (0, 1)],
        axis=-1).reshape(m1, 4 * cin)
    y1, s1, q1 = _conv_bn_stats(p1, prep["w1"], block_rows)          # [m1, cp1] bf16, phase layout
    s1c = s1[:4 * ct].reshape(4, ct).sum(axis=0)                     # fold the 4 phase blocks
    q1c = q1[:4 * ct].reshape(4, ct).sum(axis=0)
    scale1, shift1 = _bn_scale_shift(s1c, q1c, n * h2 * w2,
                                     prep["transp_gamma"], prep["transp_beta"])
    alpha1 = jnp.full((4 * ct,), prep["transp_alpha"], jnp.float32)  # scalar PReLU (module default)
    sp1 = _lane_params(jnp.tile(scale1, 4), jnp.tile(shift1, 4), alpha1, cp1)
    # BN + PReLU applied per phase, BEFORE any full-resolution interleave; bf16 out.
    x1 = _bn_prelu_apply(y1, sp1, block_rows, jnp.bfloat16).reshape(n, h, w, cp1)

    # ---- torch.cat((x, encoding), 1) + ConvBnPRelu (stride 1) ----
    # The concat is fused via split weights; the 2x2 phase interleave is folded into the patch
    # construction (x1 stays in low-res phase layout; full-res x1 is never materialized).
    # TODO(synk): the shifted-window gather below is still materialized by XLA (~k*k x input
    # bytes); an in-kernel halo formulation (manual make_async_copy, W*C in lanes) would remove it.
    padx = (pc + 1) // 2
    x1p = jnp.pad(x1, ((0, 0), (padx, padx), (padx, padx), (0, 0)))
    encp = jnp.pad(enc, ((0, 0), (pc, pc), (pc, pc), (0, 0)))
    px_list, pe_list = [], []
    for a in range(2):
        for b in range(2):
            xcols, ecols = [], []
            for dy in range(kc):
                for dx in range(kc):
                    ty, tx = a + dy - pc, b + dx - pc          # full-res offset of this tap
                    py, pxp = ty % 2, tx % 2                   # phase of the neighbour
                    oy, ox = (ty - py) // 2, (tx - pxp) // 2   # low-res spatial offset
                    ph = 2 * py + pxp
                    xcols.append(x1p[:, padx + oy:padx + oy + h,
                                     padx + ox:padx + ox + w,
                                     ph * ct:(ph + 1) * ct])
                    ecols.append(encp[:, a + dy:a + dy + h2:2,
                                      b + dx:b + dx + w2:2, :])
            px_list.append(jnp.concatenate(xcols, axis=-1).reshape(m1, kc * kc * ct))
            pe_list.append(jnp.concatenate(ecols, axis=-1).reshape(m1, kc * kc * ce))
    pxs = jnp.concatenate(px_list, axis=0)                     # [4*m1, k*k*Ct]  phase-major rows
    pes = jnp.concatenate(pe_list, axis=0)                     # [4*m1, k*k*Ce]
    y2, s2, q2 = _conv2_bn_stats(pxs, pes, prep["wx"], prep["we"], block_rows)
    scale2, shift2 = _bn_scale_shift(s2[:cout], q2[:cout], 4 * m1,
                                     prep["conv_gamma"], prep["conv_beta"])
    alpha2 = jnp.full((cout,), prep["conv_alpha"], jnp.float32)
    sp2 = _lane_params(scale2, shift2, alpha2, cp2)
    o2 = _bn_prelu_apply(y2, sp2, block_rows, jnp.float32)     # [4*m1, cp2] f32

    # Re-interleave the 4 phases on the final small-channel activation only; trim lane padding.
    o = o2.reshape(2, 2, n, h, w, cp2)[..., :cout]
    o = jnp.transpose(o, (2, 3, 0, 4, 1, 5)).reshape(n, h2, w2, cout)
    return jnp.transpose(o, (0, 3, 1, 2))                      # NHWC -> NCHW
    # TODO(synk): BatchNorm running-stat buffers (training-side state) are not modeled.


# ---------------------------------------------------------------------------
# Independent pure-JAX reference (dilated-conv formulation of ConvTranspose2d).
# Conv operands are quantised to bf16 to match the kernel's MXU operand precision.
# ---------------------------------------------------------------------------

def _q(x):
    return x.astype(jnp.bfloat16).astype(jnp.float32)


def _bn_prelu_ref(y, gamma, beta, alpha):
    mean = jnp.mean(y, axis=(0, 1, 2), keepdims=True)
    var = jnp.mean((y - mean) ** 2, axis=(0, 1, 2), keepdims=True)
    z = (y - mean) * lax.rsqrt(var + BN_EPS) * gamma + beta
    return jnp.where(z >= 0.0, z, alpha * z)


def deconv_block_reference(params, encoding_nchw, decoding_nchw):
    enc = jnp.transpose(encoding_nchw, (0, 2, 3, 1)).astype(jnp.float32)
    dec = jnp.transpose(decoding_nchw, (0, 2, 3, 1)).astype(jnp.float32)
    wt = params["transp_w"]
    k = wt.shape[2]
    p = k // 2
    op = p
    s = 2
    w_eq = jnp.transpose(wt[:, :, ::-1, ::-1], (2, 3, 0, 1))          # flipped -> HWIO
    lo, hi = k - 1 - p, k - 1 - p + op
    xp = lax.pad(dec, jnp.float32(0.0),
                 [(0, 0, 0), (lo, hi, s - 1), (lo, hi, s - 1), (0, 0, 0)])
    y = lax.conv_general_dilated(_q(xp), _q(w_eq), (1, 1), "VALID",
                                 dimension_numbers=("NHWC", "HWIO", "NHWC"),
                                 preferred_element_type=jnp.float32)
    y = y + params["transp_b"]
    x = _bn_prelu_ref(y, params["transp_gamma"], params["transp_beta"], params["transp_alpha"])
    x = jnp.concatenate([x, enc], axis=-1)

    wc = params["conv_w"]
    k2 = wc.shape[2]
    p2 = k2 // 2
    w2 = jnp.transpose(wc, (2, 3, 1, 0))
    xp2 = jnp.pad(x, ((0, 0), (p2, p2), (p2, p2), (0, 0)))
    y2 = lax.conv_general_dilated(_q(xp2), _q(w2), (1, 1), "VALID",
                                  dimension_numbers=("NHWC", "HWIO", "NHWC"),
                                  preferred_element_type=jnp.float32)
    y2 = y2 + params["conv_b"]
    y2 = _bn_prelu_ref(y2, params["conv_gamma"], params["conv_beta"], params["conv_alpha"])
    return jnp.transpose(y2, (0, 3, 1, 2))


def init_params(key, t_cin, t_cout, t_k, c_cin, c_cout, c_k):
    ks = jax.random.split(key, 8)
    f32 = jnp.float32
    return {
        # TransposeConvBnPRelu
        "transp_w": 0.1 * jax.random.normal(ks[0], (t_cin, t_cout, t_k, t_k), f32),
        "transp_b": 0.1 * jax.random.normal(ks[1], (t_cout,), f32),
        "transp_gamma": 1.0 + 0.1 * jax.random.normal(ks[2], (t_cout,), f32),
        "transp_beta": 0.1 * jax.random.normal(ks[3], (t_cout,), f32),
        "transp_alpha": jnp.float32(0.25),   # PReLU default init (scalar, num_parameters=1)
        # ConvBnPRelu
        "conv_w": 0.1 * jax.random.normal(ks[4], (c_cout, c_cin, c_k, c_k), f32),
        "conv_b": 0.1 * jax.random.normal(ks[5], (c_cout,), f32),
        "conv_gamma": 1.0 + 0.1 * jax.random.normal(ks[6], (c_cout,), f32),
        "conv_beta": 0.1 * jax.random.normal(ks[7], (c_cout,), f32),
        "conv_alpha": jnp.float32(0.25),
    }


if __name__ == "__main__":
    # DeconvBlock(transp_in=4, transp_out=4, transp_kernel=3, conv_in=8, conv_out=4, conv_kernel=3)
    key = jax.random.PRNGKey(0)
    k_p, k_enc, k_dec = jax.random.split(key, 3)
    params = init_params(k_p, t_cin=4, t_cout=4, t_k=3, c_cin=8, c_cout=4, c_k=3)

    # decoding_layer: [N, 4, 8, 8]  -> transposed conv (stride 2) -> [N, 4, 16, 16]
    # encoding_layer: [N, 4, 16, 16]; concat -> [N, 8, 16, 16]; conv -> [N, 4, 16, 16]
    encoding = jax.random.normal(k_enc, (2, 4, 16, 16), jnp.float32)
    decoding = jax.random.normal(k_dec, (2, 4, 8, 8), jnp.float32)

    prep, meta = prepare_params(params)
    # block_rows=256 at this toy scale so the second conv / BN kernels exercise the multi-tile
    # (gridded) path; the default (2048) targets realistic shapes.
    fwd = jax.jit(functools.partial(deconv_block_forward, meta=meta, block_rows=256))
    out = jax.block_until_ready(fwd(prep, encoding, decoding))

    ref = jax.block_until_ready(deconv_block_reference(params, encoding, decoding))

    assert out.shape == (2, 4, 16, 16), out.shape
    max_err = float(jnp.max(jnp.abs(out - ref)))
    # bf16 matmul operands + bf16 intermediate activations -> ~1e-2 scale tolerance.
    if not bool(jnp.allclose(out, ref, atol=2e-2, rtol=2e-2)):
        raise SystemExit(f"mismatch vs JAX reference, max abs err = {max_err}")
    print("KERNEL_OK")
</pallas_src>

<mosaic_0001>
module attributes {stable_mosaic.version = 11 : i64} {
  func.func @_conv_stats_kernel(%arg0: i32, %arg1: memref<256x16xbf16, #tpu.memory_space<vmem>>, %arg2: memref<16x128xbf16, #tpu.memory_space<vmem>>, %arg3: memref<256x128xbf16, #tpu.memory_space<vmem>>, %arg4: memref<8x128xf32, #tpu.memory_space<vmem>>) attributes {dimension_semantics = [#tpu.dimension_semantics<parallel>], iteration_bounds = array<i64: 1>, scalar_prefetch = 0 : i64, scratch_operands = 0 : i64, tpu.core_type = #tpu.core_type<tc>, window_params = [{transform_indices = @transform_0, window_bounds = array<i64: 256, 16>}, {pipeline_mode = #tpu.pipeline_mode<synchronous>, transform_indices = @transform_1, window_bounds = array<i64: 16, 128>}, {transform_indices = @transform_2, window_bounds = array<i64: 256, 128>}, {transform_indices = @transform_3, window_bounds = array<i64: 8, 128>}]} {
    %c0 = arith.constant 0 : index
    %c0_0 = arith.constant 0 : index
    %0 = vector.load %arg1[%c0, %c0_0] : memref<256x16xbf16, #tpu.memory_space<vmem>>, vector<256x16xbf16>
    %c0_1 = arith.constant 0 : index
    %c0_2 = arith.constant 0 : index
    %1 = vector.load %arg2[%c0_1, %c0_2] : memref<16x128xbf16, #tpu.memory_space<vmem>>, vector<16x128xbf16>
    %cst = arith.constant dense<0.000000e+00> : vector<256x128xf32>
    %2 = tpu.matmul %0, %1, %cst {dimension_numbers = #tpu.dot_dimension_numbers<[1], [0], [0], [1], [0, 0, 1, 1], [], []>} : vector<256x16xbf16>, vector<16x128xbf16>, vector<256x128xf32> -> vector<256x128xf32>
    %3 = arith.truncf %2 : vector<256x128xf32> to vector<256x128xbf16>
    %c0_3 = arith.constant 0 : index
    %c0_4 = arith.constant 0 : index
    %4 = vector.load %arg3[%c0_3, %c0_4] : memref<256x128xbf16, #tpu.memory_space<vmem>>, vector<256x128xbf16>
    tpu.vector_store %arg3[%c0_3, %c0_4], %3 {strides = array<i32>} : memref<256x128xbf16, #tpu.memory_space<vmem>>, vector<256x128xbf16>,
    %cst_5 = arith.constant dense<0.000000e+00> : vector<128xf32>
    %5 = vector.multi_reduction <add>, %2, %cst_5 [0] : vector<256x128xf32> to vector<128xf32>
    %6 = vector.shape_cast %5 : vector<128xf32> to vector<1x128xf32>
    %c0_6 = arith.constant 0 : index
    %c0_7 = arith.constant 0 : index
    %7 = vector.load %arg4[%c0_6, %c0_7] : memref<8x128xf32, #tpu.memory_space<vmem>>, vector<1x128xf32>
    tpu.vector_store %arg4[%c0_6, %c0_7], %6 {strides = array<i32>} : memref<8x128xf32, #tpu.memory_space<vmem>>, vector<1x128xf32>,
    %8 = arith.mulf %2, %2 : vector<256x128xf32>
    %cst_8 = arith.constant dense<0.000000e+00> : vector<128xf32>
    %9 = vector.multi_reduction <add>, %8, %cst_8 [0] : vector<256x128xf32> to vector<128xf32>
    %10 = vector.shape_cast %9 : vector<128xf32> to vector<1x128xf32>
    %c1 = arith.constant 1 : index
    %c0_9 = arith.constant 0 : index
    %11 = vector.load %arg4[%c1, %c0_9] : memref<8x128xf32, #tpu.memory_space<vmem>>, vector<1x128xf32>
    tpu.vector_store %arg4[%c1, %c0_9], %10 {strides = array<i32>} : memref<8x128xf32, #tpu.memory_space<vmem>>, vector<1x128xf32>,
    return
  }
  func.func @transform_0(%arg0: i32) -> (i32, i32) {
    %c0_i32 = arith.constant 0 : i32
    %c0_i32_0 = arith.constant 0 : i32
    return %arg0, %c0_i32 : i32, i32
  }
  func.func @transform_1(%arg0: i32) -> (i32, i32) {
    %c0_i32 = arith.constant 0 : i32
    %c0_i32_0 = arith.constant 0 : i32
    %c0_i32_1 = arith.constant 0 : i32
    return %c0_i32, %c0_i32_0 : i32, i32
  }
  func.func @transform_2(%arg0: i32) -> (i32, i32) {
    %c0_i32 = arith.constant 0 : i32
    %c0_i32_0 = arith.constant 0 : i32
    return %arg0, %c0_i32 : i32, i32
  }
  func.func @transform_3(%arg0: i32) -> (i32, i32) {
    %c0_i32 = arith.constant 0 : i32
    %c0_i32_0 = arith.constant 0 : i32
    return %arg0, %c0_i32 : i32, i32
  }
}

module attributes {stable_mosaic.version = 11 : i64} {
  func.func @_bn_prelu_kernel(%arg0: i32, %arg1: memref<256x128xbf16, #tpu.memory_space<vmem>>, %arg2: memref<8x128xf32, #tpu.memory_space<vmem>>, %arg3: memref<256x128xbf16, #tpu.memory_space<vmem>>) attributes {dimension_semantics = [#tpu.dimension_semantics<parallel>], iteration_bounds = array<i64: 1>, scalar_prefetch = 0 : i64, scratch_operands = 0 : i64, tpu.core_type = #tpu.core_type<tc>, window_params = [{transform_indices = @transform_0, window_bounds = array<i64: 256, 128>}, {pipeline_mode = #tpu.pipeline_mode<synchronous>, transform_indices = @transform_1, window_bounds = array<i64: 8, 128>}, {transform_indices = @transform_2, window_bounds = array<i64: 256, 128>}]} {
    %c0 = arith.constant 0 : index
    %c0_0 = arith.constant 0 : index
    %0 = vector.load %arg1[%c0, %c0_0] : memref<256x128xbf16, #tpu.memory_space<vmem>>, vector<256x128xbf16>
    %1 = arith.extf %0 : vector<256x128xbf16> to vector<256x128xf32>
    %c0_1 = arith.constant 0 : index
    %c0_2 = arith.constant 0 : index
    %2 = vector.load %arg2[%c0_1, %c0_2] : memref<8x128xf32, #tpu.memory_space<vmem>>, vector<1x128xf32>
    %3 = vector.broadcast %2 : vector<1x128xf32> to vector<256x128xf32>
    %4 = arith.mulf %1, %3 : vector<256x128xf32>
    %c1 = arith.constant 1 : index
    %c0_3 = arith.constant 0 : index
    %5 = vector.load %arg2[%c1, %c0_3] : memref<8x128xf32, #tpu.memory_space<vmem>>, vector<1x128xf32>
    %6 = vector.broadcast %5 : vector<1x128xf32> to vector<256x128xf32>
    %7 = arith.addf %4, %6 : vector<256x128xf32>
    %cst = arith.constant 0.000000e+00 : f32
    %8 = vector.broadcast %cst : f32 to vector<256x128xf32>
    %9 = arith.cmpf oge, %7, %8 : vector<256x128xf32>
    %c2 = arith.constant 2 : index
    %c0_4 = arith.constant 0 : index
    %10 = vector.load %arg2[%c2, %c0_4] : memref<8x128xf32, #tpu.memory_space<vmem>>, vector<1x128xf32>
    %11 = vector.broadcast %10 : vector<1x128xf32> to vector<256x128xf32>
    %12 = arith.mulf %11, %7 : vector<256x128xf32>
    %13 = arith.select %9, %7, %12 : vector<256x128xi1>, vector<256x128xf32>
    %14 = arith.truncf %13 : vector<256x128xf32> to vector<256x128xbf16>
    %c0_5 = arith.constant 0 : index
    %c0_6 = arith.constant 0 : index
    %15 = vector.load %arg3[%c0_5, %c0_6] : memref<256x128xbf16, #tpu.memory_space<vmem>>, vector<256x128xbf16>
    tpu.vector_store %arg3[%c0_5, %c0_6], %14 {strides = array<i32>} : memref<256x128xbf16, #tpu.memory_space<vmem>>, vector<256x128xbf16>,
    return
  }
  func.func @transform_0(%arg0: i32) -> (i32, i32) {
    %c0_i32 = arith.constant 0 : i32
    %c0_i32_0 = arith.constant 0 : i32
    return %arg0, %c0_i32 : i32, i32
  }
  func.func @transform_1(%arg0: i32) -> (i32, i32) {
    %c0_i32 = arith.constant 0 : i32
    %c0_i32_0 = arith.constant 0 : i32
    %c0_i32_1 = arith.constant 0 : i32
    return %c0_i32, %c0_i32_0 : i32, i32
  }
  func.func @transform_2(%arg0: i32) -> (i32, i32) {
    %c0_i32 = arith.constant 0 : i32
    %c0_i32_0 = arith.constant 0 : i32
    return %arg0, %c0_i32 : i32, i32
  }
}

module attributes {stable_mosaic.version = 11 : i64} {
  func.func @_conv2_stats_kernel(%arg0: i32, %arg1: memref<256x36xbf16, #tpu.memory_space<vmem>>, %arg2: memref<256x36xbf16, #tpu.memory_space<vmem>>, %arg3: memref<36x128xbf16, #tpu.memory_space<vmem>>, %arg4: memref<36x128xbf16, #tpu.memory_space<vmem>>, %arg5: memref<256x128xbf16, #tpu.memory_space<vmem>>, %arg6: memref<8x128xf32, #tpu.memory_space<vmem>>) attributes {dimension_semantics = [#tpu.dimension_semantics<parallel>], iteration_bounds = array<i64: 2>, scalar_prefetch = 0 : i64, scratch_operands = 0 : i64, tpu.core_type = #tpu.core_type<tc>, window_params = [{transform_indices = @transform_0, window_bounds = array<i64: 256, 36>}, {transform_indices = @transform_1, window_bounds = array<i64: 256, 36>}, {pipeline_mode = #tpu.pipeline_mode<synchronous>, transform_indices = @transform_2, window_bounds = array<i64: 36, 128>}, {pipeline_mode = #tpu.pipeline_mode<synchronous>, transform_indices = @transform_3, window_bounds = array<i64: 36, 128>}, {transform_indices = @transform_4, window_bounds = array<i64: 256, 128>}, {transform_indices = @transform_5, window_bounds = array<i64: 8, 128>}]} {
    %c0 = arith.constant 0 : index
    %c0_0 = arith.constant 0 : index
    %0 = vector.load %arg1[%c0, %c0_0] : memref<256x36xbf16, #tpu.memory_space<vmem>>, vector<256x36xbf16>
    %c0_1 = arith.constant 0 : index
    %c0_2 = arith.constant 0 : index
    %1 = vector.load %arg3[%c0_1, %c0_2] : memref<36x128xbf16, #tpu.memory_space<vmem>>, vector<36x128xbf16>
    %cst = arith.constant dense<0.000000e+00> : vector<256x128xf32>
    %2 = tpu.matmul %0, %1, %cst {dimension_numbers = #tpu.dot_dimension_numbers<[1], [0], [0], [1], [0, 0, 1, 1], [], []>} : vector<256x36xbf16>, vector<36x128xbf16>, vector<256x128xf32> -> vector<256x128xf32>
    %c0_3 = arith.constant 0 : index
    %c0_4 = arith.constant 0 : index
    %3 = vector.load %arg2[%c0_3, %c0_4] : memref<256x36xbf16, #tpu.memory_space<vmem>>, vector<256x36xbf16>
    %c0_5 = arith.constant 0 : index
    %c0_6 = arith.constant 0 : index
    %4 = vector.load %arg4[%c0_5, %c0_6] : memref<36x128xbf16, #tpu.memory_space<vmem>>, vector<36x128xbf16>
    %cst_7 = arith.constant dense<0.000000e+00> : vector<256x128xf32>
    %5 = tpu.matmul %3, %4, %cst_7 {dimension_numbers = #tpu.dot_dimension_numbers<[1], [0], [0], [1], [0, 0, 1, 1], [], []>} : vector<256x36xbf16>, vector<36x128xbf16>, vector<256x128xf32> -> vector<256x128xf32>
    %6 = arith.addf %2, %5 : vector<256x128xf32>
    %7 = arith.truncf %6 : vector<256x128xf32> to vector<256x128xbf16>
    %c0_8 = arith.constant 0 : index
    %c0_9 = arith.constant 0 : index
    %8 = vector.load %arg5[%c0_8, %c0_9] : memref<256x128xbf16, #tpu.memory_space<vmem>>, vector<256x128xbf16>
    tpu.vector_store %arg5[%c0_8, %c0_9], %7 {strides = array<i32>} : memref<256x128xbf16, #tpu.memory_space<vmem>>, vector<256x128xbf16>,
    %cst_10 = arith.constant dense<0.000000e+00> : vector<128xf32>
    %9 = vector.multi_reduction <add>, %6, %cst_10 [0] : vector<256x128xf32> to vector<128xf32>
    %10 = vector.shape_cast %9 : vector<128xf32> to vector<1x128xf32>
    %c0_11 = arith.constant 0 : index
    %c0_12 = arith.constant 0 : index
    %11 = vector.load %arg6[%c0_11, %c0_12] : memref<8x128xf32, #tpu.memory_space<vmem>>, vector<1x128xf32>
    tpu.vector_store %arg6[%c0_11, %c0_12], %10 {strides = array<i32>} : memref<8x128xf32, #tpu.memory_space<vmem>>, vector<1x128xf32>,
    %12 = arith.mulf %6, %6 : vector<256x128xf32>
    %cst_13 = arith.constant dense<0.000000e+00> : vector<128xf32>
    %13 = vector.multi_reduction <add>, %12, %cst_13 [0] : vector<256x128xf32> to vector<128xf32>
    %14 = vector.shape_cast %13 : vector<128xf32> to vector<1x128xf32>
    %c1 = arith.constant 1 : index
    %c0_14 = arith.constant 0 : index
    %15 = vector.load %arg6[%c1, %c0_14] : memref<8x128xf32, #tpu.memory_space<vmem>>, vector<1x128xf32>
    tpu.vector_store %arg6[%c1, %c0_14], %14 {strides = array<i32>} : memref<8x128xf32, #tpu.memory_space<vmem>>, vector<1x128xf32>,
    return
  }
  func.func @transform_0(%arg0: i32) -> (i32, i32) {
    %c0_i32 = arith.constant 0 : i32
    %c0_i32_0 = arith.constant 0 : i32
    return %arg0, %c0_i32 : i32, i32
  }
  func.func @transform_1(%arg0: i32) -> (i32, i32) {
    %c0_i32 = arith.constant 0 : i32
    %c0_i32_0 = arith.constant 0 : i32
    return %arg0, %c0_i32 : i32, i32
  }
  func.func @transform_2(%arg0: i32) -> (i32, i32) {
    %c0_i32 = arith.constant 0 : i32
    %c0_i32_0 = arith.constant 0 : i32
    %c0_i32_1 = arith.constant 0 : i32
    return %c0_i32, %c0_i32_0 : i32, i32
  }
  func.func @transform_3(%arg0: i32) -> (i32, i32) {
    %c0_i32 = arith.constant 0 : i32
    %c0_i32_0 = arith.constant 0 : i32
    %c0_i32_1 = arith.constant 0 : i32
    return %c0_i32, %c0_i32_0 : i32, i32
  }
  func.func @transform_4(%arg0: i32) -> (i32, i32) {
    %c0_i32 = arith.constant 0 : i32
    %c0_i32_0 = arith.constant 0 : i32
    return %arg0, %c0_i32 : i32, i32
  }
  func.func @transform_5(%arg0: i32) -> (i32, i32) {
    %c0_i32 = arith.constant 0 : i32
    %c0_i32_0 = arith.constant 0 : i32
    return %arg0, %c0_i32 : i32, i32
  }
}

module attributes {stable_mosaic.version = 11 : i64} {
  func.func @_bn_prelu_kernel(%arg0: i32, %arg1: memref<256x128xbf16, #tpu.memory_space<vmem>>, %arg2: memref<8x128xf32, #tpu.memory_space<vmem>>, %arg3: memref<256x128xf32, #tpu.memory_space<vmem>>) attributes {dimension_semantics = [#tpu.dimension_semantics<parallel>], iteration_bounds = array<i64: 2>, scalar_prefetch = 0 : i64, scratch_operands = 0 : i64, tpu.core_type = #tpu.core_type<tc>, window_params = [{transform_indices = @transform_0, window_bounds = array<i64: 256, 128>}, {pipeline_mode = #tpu.pipeline_mode<synchronous>, transform_indices = @transform_1, window_bounds = array<i64: 8, 128>}, {transform_indices = @transform_2, window_bounds = array<i64: 256, 128>}]} {
    %c0 = arith.constant 0 : index
    %c0_0 = arith.constant 0 : index
    %0 = vector.load %arg1[%c0, %c0_0] : memref<256x128xbf16, #tpu.memory_space<vmem>>, vector<256x128xbf16>
    %1 = arith.extf %0 : vector<256x128xbf16> to vector<256x128xf32>
    %c0_1 = arith.constant 0 : index
    %c0_2 = arith.constant 0 : index
    %2 = vector.load %arg2[%c0_1, %c0_2] : memref<8x128xf32, #tpu.memory_space<vmem>>, vector<1x128xf32>
    %3 = vector.broadcast %2 : vector<1x128xf32> to vector<256x128xf32>
    %4 = arith.mulf %1, %3 : vector<256x128xf32>
    %c1 = arith.constant 1 : index
    %c0_3 = arith.constant 0 : index
    %5 = vector.load %arg2[%c1, %c0_3] : memref<8x128xf32, #tpu.memory_space<vmem>>, vector<1x128xf32>
    %6 = vector.broadcast %5 : vector<1x128xf32> to vector<256x128xf32>
    %7 = arith.addf %4, %6 : vector<256x128xf32>
    %cst = arith.constant 0.000000e+00 : f32
    %8 = vector.broadcast %cst : f32 to vector<256x128xf32>
    %9 = arith.cmpf oge, %7, %8 : vector<256x128xf32>
    %c2 = arith.constant 2 : index
    %c0_4 = arith.constant 0 : index
    %10 = vector.load %arg2[%c2, %c0_4] : memref<8x128xf32, #tpu.memory_space<vmem>>, vector<1x128xf32>
    %11 = vector.broadcast %10 : vector<1x128xf32> to vector<256x128xf32>
    %12 = arith.mulf %11, %7 : vector<256x128xf32>
    %13 = arith.select %9, %7, %12 : vector<256x128xi1>, vector<256x128xf32>
    %c0_5 = arith.constant 0 : index
    %c0_6 = arith.constant 0 : index
    %14 = vector.load %arg3[%c0_5, %c0_6] : memref<256x128xf32, #tpu.memory_space<vmem>>, vector<256x128xf32>
    tpu.vector_store %arg3[%c0_5, %c0_6], %13 {strides = array<i32>} : memref<256x128xf32, #tpu.memory_space<vmem>>, vector<256x128xf32>,
    return
  }
  func.func @transform_0(%arg0: i32) -> (i32, i32) {
    %c0_i32 = arith.constant 0 : i32
    %c0_i32_0 = arith.constant 0 : i32
    return %arg0, %c0_i32 : i32, i32
  }
  func.func @transform_1(%arg0: i32) -> (i32, i32) {
    %c0_i32 = arith.constant 0 : i32
    %c0_i32_0 = arith.constant 0 : i32
    %c0_i32_1 = arith.constant 0 : i32
    return %c0_i32, %c0_i32_0 : i32, i32
  }
  func.func @transform_2(%arg0: i32) -> (i32, i32) {
    %c0_i32 = arith.constant 0 : i32
    %c0_i32_0 = arith.constant 0 : i32
    return %arg0, %c0_i32 : i32, i32
  }
}

</mosaic_0001>

<llo_original>
// kernel: tile.13
$region0: #{tile.13}
  #allocation0 [shape = 's32[1]{0}', space=sflag, size = 0x4, scoped, tag = 'scoped memory for tile.13']
  %s0 = inlined_call_operand.vmem [shape: f32[4], index: 0, kind: input, shape index: {}]
  %s1 = inlined_call_operand.vmem [shape: f32[4,4], index: 1, kind: output, shape index: {}]
  // Predicated region
  $region2: #{tile.13} parent=0 // pred_check
    _
  $region3: #{tile.13} parent=0 // pred_check_branch
    %3 = sbr.rel (0) target = $region5
  $region4: #{tile.13} parent=0 // pred_region
    _
  $region5: #{tile.13} parent=0 // pred_fallthru
    _
  %v4 = vld [vmem:[%s0] ss:$0 sm:$0xff]
  %5 = vst [vmem:[%s1] sm:$0xf] %v4

// kernel: deconv_block_forward.5
$region0: #{deconv_block_forward.5}
  #allocation0 [shape = 'u32[]', space=smem, size = 0x4, offset = 0x4, fixed_abs, tag = 'smem constant byte address 0x4 - core index']
  #allocation1 [shape = 'u32[144,128]{1,0:T(1,128)}', space=vmem, size = 0x12000, scoped, tag = 'internal scratch']
  %s0 = inlined_call_operand.vmem [shape: bf16[256,128], index: 0, kind: input, shape index: {}]
  %s1 = inlined_call_operand.vmem [shape: f32[8,128], index: 1, kind: input, shape index: {}]
  %s2 = inlined_call_operand.vmem [shape: bf16[256,128], index: 2, kind: output, shape index: {}]
  %s3 = sld [smem:[#allocation0]]
  $region18: #{deconv_block_forward.5} parent=0
    _
  %s5 = ssub.s32 1, %s3
  %s6 = scalar_select 0, %s5, %s3
  // Predicated region
  $region2: #{deconv_block_forward.5} parent=0 // pred_check
    _
  $region3: #{deconv_block_forward.5} parent=0 // pred_check_branch
    %8 = sbr.rel (0) target = $region5
  $region4: #{deconv_block_forward.5} parent=0 // pred_region
    _
  $region5: #{deconv_block_forward.5} parent=0 // pred_fallthru
    _
  // Predicated region
  $region6: #{deconv_block_forward.5} parent=0 // pred_check
    _
  $region7: #{deconv_block_forward.5} parent=0 // pred_check_branch
    %10 = sbr.rel (0) target = $region9
  $region8: #{deconv_block_forward.5} parent=0 // pred_region
    _
  $region9: #{deconv_block_forward.5} parent=0 // pred_fallthru
    _
  %v11 = vld [vmem:[%s0] sm:$0xf]
  %v12 = vld [vmem:[%s0 + $0x4] sm:$0xf]
  %v13 = vld [vmem:[%s0 + $0x8] sm:$0xf]
  %v14 = vld [vmem:[%s0 + $0xc] sm:$0xf]
  %v15 = vld [vmem:[%s0 + $0x10] sm:$0xf]
  %v16 = vld [vmem:[%s0 + $0x14] sm:$0xf]
  %v17 = vld [vmem:[%s0 + $0x18] sm:$0xf]
  %v18 = vld [vmem:[%s0 + $0x1c] sm:$0xf]
  %v19 = vld [vmem:[%s0 + $0x20] sm:$0xf]
  %v20 = vld [vmem:[%s0 + $0x24] sm:$0xf]
  %v21 = vld [vmem:[%s0 + $0x28] sm:$0xf]
  %v22 = vld [vmem:[%s0 + $0x2c] sm:$0xf]
  %v23 = vld [vmem:[%s0 + $0x30] sm:$0xf]
  %v24 = vld [vmem:[%s0 + $0x34] sm:$0xf]
  %v25 = vld [vmem:[%s0 + $0x38] sm:$0xf]
  %v26 = vld [vmem:[%s0 + $0x3c] sm:$0xf]
  %v27 = vld [vmem:[%s0 + $0x40] sm:$0xf]
  %v28 = vld [vmem:[%s0 + $0x44] sm:$0xf]
  %v29 = vld [vmem:[%s0 + $0x48] sm:$0xf]
  %v30 = vld [vmem:[%s0 + $0x4c] sm:$0xf]
  %v31 = vld [vmem:[%s0 + $0x50] sm:$0xf]
  %v32 = vld [vmem:[%s0 + $0x54] sm:$0xf]
  %v33 = vld [vmem:[%s0 + $0x58] sm:$0xf]
  %v34 = vld [vmem:[%s0 + $0x5c] sm:$0xf]
  %v35 = vld [vmem:[%s0 + $0x60] sm:$0xf]
  %v36 = vld [vmem:[%s0 + $0x64] sm:$0xf]
  %v37 = vld [vmem:[%s0 + $0x68] sm:$0xf]
  %v38 = vld [vmem:[%s0 + $0x6c] sm:$0xf]
  %v39 = vld [vmem:[%s0 + $0x70] sm:$0xf]
  %v40 = vld [vmem:[%s0 + $0x74] sm:$0xf]
  %v41 = vld [vmem:[%s0 + $0x78] sm:$0xf]
  %v42 = vld [vmem:[%s0 + $0x7c] sm:$0xf]
  %v43 = vunpack.c.l.bf16 %v11
  %v44 = vunpack.c.l.bf16 %v12
  %v45 = vunpack.c.l.bf16 %v13
  %v46 = vunpack.c.l.bf16 %v14
  %v47 = vunpack.c.l.bf16 %v15
  %v48 = vunpack.c.l.bf16 %v16
  %v49 = vunpack.c.l.bf16 %v17
  %v50 = vunpack.c.l.bf16 %v18
  %v51 = vunpack.c.l.bf16 %v19
  %v52 = vunpack.c.l.bf16 %v20
  %v53 = vunpack.c.l.bf16 %v21
  %v54 = vunpack.c.l.bf16 %v22
  %v55 = vunpack.c.l.bf16 %v23
  %v56 = vunpack.c.l.bf16 %v24
  %v57 = vunpack.c.l.bf16 %v25
  %v58 = vunpack.c.l.bf16 %v26
  %v59 = vunpack.c.l.bf16 %v27
  %v60 = vunpack.c.l.bf16 %v28
  %v61 = vunpack.c.l.bf16 %v29
  %v62 = vunpack.c.l.bf16 %v30
  %v63 = vunpack.c.l.bf16 %v31
  %v64 = vunpack.c.l.bf16 %v32
  %v65 = vunpack.c.l.bf16 %v33
  %v66 = vunpack.c.l.bf16 %v34
  %v67 = vunpack.c.l.bf16 %v35
  %v68 = vunpack.c.l.bf16 %v36
  %v69 = vunpack.c.l.bf16 %v37
  %v70 = vunpack.c.l.bf16 %v38
  %v71 = vunpack.c.l.bf16 %v39
  %v72 = vunpack.c.l.bf16 %v40
  %v73 = vunpack.c.l.bf16 %v41
  %v74 = vunpack.c.l.bf16 %v42
  %v75 = vld [vmem:[%s1] sm:$0x1]
  %v76 = vlaneseq
  %v77 = vshrl.u32 %v76, 7
  %v78 = vsub.s32 0, %v77
  %v79 = vrot.slane %v75, %v78
  %v80 = vmul.f32 %v43, %v79
  %v81 = vmul.f32 %v44, %v79
  %v82 = vmul.f32 %v45, %v79
  %v83 = vmul.f32 %v46, %v79
  %v84 = vmul.f32 %v47, %v79
  %v85 = vmul.f32 %v48, %v79
  %v86 = vmul.f32 %v49, %v79
  %v87 = vmul.f32 %v50, %v79
  %v88 = vmul.f32 %v51, %v79
  %v89 = vmul.f32 %v52, %v79
  %v90 = vmul.f32 %v53, %v79
  %v91 = vmul.f32 %v54, %v79
  %v92 = vmul.f32 %v55, %v79
  %v93 = vmul.f32 %v56, %v79
  %v94 = vmul.f32 %v57, %v79
  %v95 = vmul.f32 %v58, %v79
  %v96 = vmul.f32 %v59, %v79
  %v97 = vmul.f32 %v60, %v79
  %v98 = vmul.f32 %v61, %v79
  %v99 = vmul.f32 %v62, %v79
  %v100 = vmul.f32 %v63, %v79
  %v101 = vmul.f32 %v64, %v79
  %v102 = vmul.f32 %v65, %v79
  %v103 = vmul.f32 %v66, %v79
  %v104 = vmul.f32 %v67, %v79
  %v105 = vmul.f32 %v68, %v79
  %v106 = vmul.f32 %v69, %v79
  %v107 = vmul.f32 %v70, %v79
  %v108 = vmul.f32 %v71, %v79
  %v109 = vmul.f32 %v72, %v79
  %v110 = vmul.f32 %v73, %v79
  %v111 = vmul.f32 %v74, %v79
  %v112 = vld [vmem:[%s1 + $0x1] sm:$0x1]
  %v113 = vlaneseq
  %v114 = vshrl.u32 %v113, 7
  %v115 = vsub.s32 0, %v114
  %v116 = vrot.slane %v112, %v115
  %v117 = vadd.f32 %v80, %v116
  %v118 = vadd.f32 %v81, %v116
  %v119 = vadd.f32 %v82, %v116
  %v120 = vadd.f32 %v83, %v116
  %v121 = vadd.f32 %v84, %v116
  %v122 = vadd.f32 %v85, %v116
  %v123 = vadd.f32 %v86, %v116
  %v124 = vadd.f32 %v87, %v116
  %v125 = vadd.f32 %v88, %v116
  %v126 = vadd.f32 %v89, %v116
  %v127 = vadd.f32 %v90, %v116
  %v128 = vadd.f32 %v91, %v116
  %v129 = vadd.f32 %v92, %v116
  %v130 = vadd.f32 %v93, %v116
  %v131 = vadd.f32 %v94, %v116
  %v132 = vadd.f32 %v95, %v116
  %v133 = vadd.f32 %v96, %v116
  %v134 = vadd.f32 %v97, %v116
  %v135 = vadd.f32 %v98, %v116
  %v136 = vadd.f32 %v99, %v116
  %v137 = vadd.f32 %v100, %v116
  %v138 = vadd.f32 %v101, %v116
  %v139 = vadd.f32 %v102, %v116
  %v140 = vadd.f32 %v103, %v116
  %v141 = vadd.f32 %v104, %v116
  %v142 = vadd.f32 %v105, %v116
  %v143 = vadd.f32 %v106, %v116
  %v144 = vadd.f32 %v107, %v116
  %v145 = vadd.f32 %v108, %v116
  %v146 = vadd.f32 %v109, %v116
  %v147 = vadd.f32 %v110, %v116
  %v148 = vadd.f32 %v111, %v116
  %vm149 = vcmp.ge.f32.partialorder %v117, 0.0
  %vm150 = vcmp.ge.f32.partialorder %v118, 0.0
  %vm151 = vcmp.ge.f32.partialorder %v119, 0.0
  %vm152 = vcmp.ge.f32.partialorder %v120, 0.0
  %vm153 = vcmp.ge.f32.partialorder %v121, 0.0
  %vm154 = vcmp.ge.f32.partialorder %v122, 0.0
  %vm155 = vcmp.ge.f32.partialorder %v123, 0.0
  %vm156 = vcmp.ge.f32.partialorder %v124, 0.0
  %vm157 = vcmp.ge.f32.partialorder %v125, 0.0
  %vm158 = vcmp.ge.f32.partialorder %v126, 0.0
  %vm159 = vcmp.ge.f32.partialorder %v127, 0.0
  %vm160 = vcmp.ge.f32.partialorder %v128, 0.0
  %vm161 = vcmp.ge.f32.partialorder %v129, 0.0
  %vm162 = vcmp.ge.f32.partialorder %v130, 0.0
  %vm163 = vcmp.ge.f32.partialorder %v131, 0.0
  %vm164 = vcmp.ge.f32.partialorder %v132, 0.0
  %vm165 = vcmp.ge.f32.partialorder %v133, 0.0
  %vm166 = vcmp.ge.f32.partialorder %v134, 0.0
  %vm167 = vcmp.ge.f32.partialorder %v135, 0.0
  %vm168 = vcmp.ge.f32.partialorder %v136, 0.0
  %vm169 = vcmp.ge.f32.partialorder %v137, 0.0
  %vm170 = vcmp.ge.f32.partialorder %v138, 0.0
  %vm171 = vcmp.ge.f32.partialorder %v139, 0.0
  %vm172 = vcmp.ge.f32.partialorder %v140, 0.0
  %vm173 = vcmp.ge.f32.partialorder %v141, 0.0
  %vm174 = vcmp.ge.f32.partialorder %v142, 0.0
  %vm175 = vcmp.ge.f32.partialorder %v143, 0.0
  %vm176 = vcmp.ge.f32.partialorder %v144, 0.0
  %vm177 = vcmp.ge.f32.partialorder %v145, 0.0
  %vm178 = vcmp.ge.f32.partialorder %v146, 0.0
  %vm179 = vcmp.ge.f32.partialorder %v147, 0.0
  %vm180 = vcmp.ge.f32.partialorder %v148, 0.0
  %v181 = vld [vmem:[%s1 + $0x2] sm:$0x1]
  %v182 = vlaneseq
  %v183 = vshrl.u32 %v182, 7
  %v184 = vsub.s32 0, %v183
  %v185 = vrot.slane %v181, %v184
  %v186 = vmul.f32 %v185, %v117
  %v187 = vmul.f32 %v185, %v118
  %v188 = vmul.f32 %v185, %v119
  %v189 = vmul.f32 %v185, %v120
  %v190 = vmul.f32 %v185, %v121
  %v191 = vmul.f32 %v185, %v122
  %v192 = vmul.f32 %v185, %v123
  %v193 = vmul.f32 %v185, %v124
  %v194 = vmul.f32 %v185, %v125
  %v195 = vmul.f32 %v185, %v126
  %v196 = vmul.f32 %v185, %v127
  %v197 = vmul.f32 %v185, %v128
  %v198 = vmul.f32 %v185, %v129
  %v199 = vmul.f32 %v185, %v130
  %v200 = vmul.f32 %v185, %v131
  %v201 = vmul.f32 %v185, %v132
  %v202 = vmul.f32 %v185, %v133
  %v203 = vmul.f32 %v185, %v134
  %v204 = vmul.f32 %v185, %v135
  %v205 = vmul.f32 %v185, %v136
  %v206 = vmul.f32 %v185, %v137
  %v207 = vmul.f32 %v185, %v138
  %v208 = vmul.f32 %v185, %v139
  %v209 = vmul.f32 %v185, %v140
  %v210 = vmul.f32 %v185, %v141
  %v211 = vmul.f32 %v185, %v142
  %v212 = vmul.f32 %v185, %v143
  %v213 = vmul.f32 %v185, %v144
  %v214 = vmul.f32 %v185, %v145
  %v215 = vmul.f32 %v185, %v146
  %v216 = vmul.f32 %v185, %v147
  %v217 = vmul.f32 %v185, %v148
  %v218 = vsel %vm149, %v117, %v186
  %v219 = vsel %vm150, %v118, %v187
  %v220 = vsel %vm151, %v119, %v188
  %v221 = vsel %vm152, %v120, %v189
  %v222 = vsel %vm153, %v121, %v190
  %v223 = vsel %vm154, %v122, %v191
  %v224 = vsel %vm155, %v123, %v192
  %v225 = vsel %vm156, %v124, %v193
  %v226 = vsel %vm157, %v125, %v194
  %v227 = vsel %vm158, %v126, %v195
  %v228 = vsel %vm159, %v127, %v196
  %v229 = vsel %vm160, %v128, %v197
  %v230 = vsel %vm161, %v129, %v198
  %v231 = vsel %vm162, %v130, %v199
  %v232 = vsel %vm163, %v131, %v200
  %v233 = vsel %vm164, %v132, %v201
  %v234 = vsel %vm165, %v133, %v202
  %v235 = vsel %vm166, %v134, %v203
  %v236 = vsel %vm167, %v135, %v204
  %v237 = vsel %vm168, %v136, %v205
  %v238 = vsel %vm169, %v137, %v206
  %v239 = vsel %vm170, %v138, %v207
  %v240 = vsel %vm171, %v139, %v208
  %v241 = vsel %vm172, %v140, %v209
  %v242 = vsel %vm173, %v141, %v210
  %v243 = vsel %vm174, %v142, %v211
  %v244 = vsel %vm175, %v143, %v212
  %v245 = vsel %vm176, %v144, %v213
  %v246 = vsel %vm177, %v145, %v214
  %v247 = vsel %vm178, %v146, %v215
  %v248 = vsel %vm179, %v147, %v216
  %v249 = vsel %vm180, %v148, %v217
  %v250 = vpack.c.bf16 %v219, %v218
  %v251 = vpack.c.bf16 %v221, %v220
  %v252 = vpack.c.bf16 %v223, %v222
  %v253 = vpack.c.bf16 %v225, %v224
  %v254 = vpack.c.bf16 %v227, %v226
  %v255 = vpack.c.bf16 %v229, %v228
  %v256 = vpack.c.bf16 %v231, %v230
  %v257 = vpack.c.bf16 %v233, %v232
  %v258 = vpack.c.bf16 %v235, %v234
  %v259 = vpack.c.bf16 %v237, %v236
  %v260 = vpack.c.bf16 %v239, %v238
  %v261 = vpack.c.bf16 %v241, %v240
  %v262 = vpack.c.bf16 %v243, %v242
  %v263 = vpack.c.bf16 %v245, %v244
  %v264 = vpack.c.bf16 %v247, %v246
  %v265 = vpack.c.bf16 %v249, %v248
  %v282 = vunpack.c.l.b16 %v250
  %v283 = vunpack.c.h.b16 %v250
  %v284 = vunpack.c.l.b16 %v251
  %v285 = vunpack.c.h.b16 %v251
  %v286 = vunpack.c.l.b16 %v252
  %v287 = vunpack.c.h.b16 %v252
  %v288 = vunpack.c.l.b16 %v253
  %v289 = vunpack.c.h.b16 %v253
  %v290 = vunpack.c.l.b16 %v254
  %v291 = vunpack.c.h.b16 %v254
  %v292 = vunpack.c.l.b16 %v255
  %v293 = vunpack.c.h.b16 %v255
  %v294 = vunpack.c.l.b16 %v256
  %v295 = vunpack.c.h.b16 %v256
  %v296 = vunpack.c.l.b16 %v257
  %v297 = vunpack.c.h.b16 %v257
  %v298 = vunpack.c.l.b16 %v258
  %v299 = vunpack.c.h.b16 %v258
  %v300 = vunpack.c.l.b16 %v259
  %v301 = vunpack.c.h.b16 %v259
  %v302 = vunpack.c.l.b16 %v260
  %v303 = vunpack.c.h.b16 %v260
  %v304 = vunpack.c.l.b16 %v261
  %v305 = vunpack.c.h.b16 %v261
  %v306 = vunpack.c.l.b16 %v262
  %v307 = vunpack.c.h.b16 %v262
  %v308 = vunpack.c.l.b16 %v263
  %v309 = vunpack.c.h.b16 %v263
  %v310 = vunpack.c.l.b16 %v264
  %v311 = vunpack.c.h.b16 %v264
  %v312 = vunpack.c.l.b16 %v265
  %v313 = vunpack.c.h.b16 %v265
  %v314 = vpack.c.b16 %v282, %v282
  %v315 = vpack.c.b16 %v283, %v283
  %v316 = vpack.c.b16 %v284, %v284
  %v317 = vpack.c.b16 %v285, %v285
  %v318 = vpack.c.b16 %v286, %v286
  %v319 = vpack.c.b16 %v287, %v287
  %v320 = vpack.c.b16 %v288, %v288
  %v321 = vpack.c.b16 %v289, %v289
  %v322 = vpack.c.b16 %v290, %v290
  %v323 = vpack.c.b16 %v291, %v291
  %v324 = vpack.c.b16 %v292, %v292
  %v325 = vpack.c.b16 %v293, %v293
  %v326 = vpack.c.b16 %v294, %v294
  %v327 = vpack.c.b16 %v295, %v295
  %v328 = vpack.c.b16 %v296, %v296
  %v329 = vpack.c.b16 %v297, %v297
  %v330 = vpack.c.b16 %v298, %v298
  %v331 = vpack.c.b16 %v299, %v299
  %v332 = vpack.c.b16 %v300, %v300
  %v333 = vpack.c.b16 %v301, %v301
  %v334 = vpack.c.b16 %v302, %v302
  %v335 = vpack.c.b16 %v303, %v303
  %v336 = vpack.c.b16 %v304, %v304
  %v337 = vpack.c.b16 %v305, %v305
  %v338 = vpack.c.b16 %v306, %v306
  %v339 = vpack.c.b16 %v307, %v307
  %v340 = vpack.c.b16 %v308, %v308
  %v341 = vpack.c.b16 %v309, %v309
  %v342 = vpack.c.b16 %v310, %v310
  %v343 = vpack.c.b16 %v311, %v311
  %v344 = vpack.c.b16 %v312, %v312
  %v345 = vpack.c.b16 %v313, %v313
  %378 = vst [vmem:[%s2] sm:$0xf] %v314
  %379 = vst [vmem:[%s2 + $0x4] sm:$0xf] %v315
  %380 = vst [vmem:[%s2 + $0x8] sm:$0xf] %v316
  %381 = vst [vmem:[%s2 + $0xc] sm:$0xf] %v317
  %382 = vst [vmem:[%s2 + $0x10] sm:$0xf] %v318
  %383 = vst [vmem:[%s2 + $0x14] sm:$0xf] %v319
  %384 = vst [vmem:[%s2 + $0x18] sm:$0xf] %v320
  %385 = vst [vmem:[%s2 + $0x1c] sm:$0xf] %v321
  %386 = vst [vmem:[%s2 + $0x20] sm:$0xf] %v322
  %387 = vst [vmem:[%s2 + $0x24] sm:$0xf] %v323
  %388 = vst [vmem:[%s2 + $0x28] sm:$0xf] %v324
  %389 = vst [vmem:[%s2 + $0x2c] sm:$0xf] %v325
  %390 = vst [vmem:[%s2 + $0x30] sm:$0xf] %v326
  %391 = vst [vmem:[%s2 + $0x34] sm:$0xf] %v327
  %392 = vst [vmem:[%s2 + $0x38] sm:$0xf] %v328
  %393 = vst [vmem:[%s2 + $0x3c] sm:$0xf] %v329
  %394 = vst [vmem:[%s2 + $0x40] sm:$0xf] %v330
  %395 = vst [vmem:[%s2 + $0x44] sm:$0xf] %v331
  %396 = vst [vmem:[%s2 + $0x48] sm:$0xf] %v332
  %397 = vst [vmem:[%s2 + $0x4c] sm:$0xf] %v333
  %398 = vst [vmem:[%s2 + $0x50] sm:$0xf] %v334
  %399 = vst [vmem:[%s2 + $0x54] sm:$0xf] %v335
  %400 = vst [vmem:[%s2 + $0x58] sm:$0xf] %v336
  %401 = vst [vmem:[%s2 + $0x5c] sm:$0xf] %v337
  %402 = vst [vmem:[%s2 + $0x60] sm:$0xf] %v338
  %403 = vst [vmem:[%s2 + $0x64] sm:$0xf] %v339
  %404 = vst [vmem:[%s2 + $0x68] sm:$0xf] %v340
  %405 = vst [vmem:[%s2 + $0x6c] sm:$0xf] %v341
  %406 = vst [vmem:[%s2 + $0x70] sm:$0xf] %v342
  %407 = vst [vmem:[%s2 + $0x74] sm:$0xf] %v343
  %408 = vst [vmem:[%s2 + $0x78] sm:$0xf] %v344
  %409 = vst [vmem:[%s2 + $0x7c] sm:$0xf] %v345
  // Predicated region
  $region10: #{deconv_block_forward.5} parent=0 // pred_check
    _
  $region11: #{deconv_block_forward.5} parent=0 // pred_check_branch
    %411 = sbr.rel (0) target = $region13
  $region12: #{deconv_block_forward.5} parent=0 // pred_region
    _
  $region13: #{deconv_block_forward.5} parent=0 // pred_fallthru
    _
  // Predicated region
  $region14: #{deconv_block_forward.5} parent=0 // pred_check
    _
  $region15: #{deconv_block_forward.5} parent=0 // pred_check_branch
    %413 = sbr.rel (0) target = $region17
  $region16: #{deconv_block_forward.5} parent=0 // pred_region
    _
  $region17: #{deconv_block_forward.5} parent=0 // pred_fallthru
    _

// kernel: deconv_block_forward.4
$region0: #{deconv_block_forward.4}
  #allocation0 [shape = 'u32[]', space=smem, size = 0x4, offset = 0x4, fixed_abs, tag = 'smem constant byte address 0x4 - core index']
  #allocation1 [shape = 'u32[144,128]{1,0:T(1,128)}', space=vmem, size = 0x12000, scoped, tag = 'internal scratch']
  %s0 = inlined_call_operand.vmem [shape: bf16[256,16], index: 0, kind: input, shape index: {}]
  %s1 = inlined_call_operand.vmem [shape: bf16[16,128], index: 1, kind: input, shape index: {}]
  %s2 = inlined_call_operand.vmem [shape: bf16[256,128], index: 2, kind: output, shape index: {0}]
  %s3 = inlined_call_operand.vmem [shape: f32[8,128], index: 3, kind: output, shape index: {1}]
  %4 = xla_tuple %s2, %s3
  %s5 = sld [smem:[#allocation0]]
  $region26: #{deconv_block_forward.4} parent=0
    _
  %s7 = ssub.s32 1, %s5
  %s8 = scalar_select 0, %s7, %s5
  // Predicated region
  $region2: #{deconv_block_forward.4} parent=0 // pred_check
    _
  $region3: #{deconv_block_forward.4} parent=0 // pred_check_branch
    %10 = sbr.rel (0) target = $region5
  $region4: #{deconv_block_forward.4} parent=0 // pred_region
    _
  $region5: #{deconv_block_forward.4} parent=0 // pred_fallthru
    _
  // Predicated region
  $region6: #{deconv_block_forward.4} parent=0 // pred_check
    _
  $region7: #{deconv_block_forward.4} parent=0 // pred_check_branch
    %12 = sbr.rel (0) target = $region9
  $region8: #{deconv_block_forward.4} parent=0 // pred_region
    _
  $region9: #{deconv_block_forward.4} parent=0 // pred_fallthru
    _
  %v14 = vld [vmem:[%s0] sm:$0xf]
  %v15 = vld [vmem:[%s0 + $0x4] sm:$0xf]
  %v16 = vld [vmem:[%s0 + $0x8] sm:$0xf]
  %v17 = vld [vmem:[%s0 + $0xc] sm:$0xf]
  %v18 = vld [vmem:[%s0 + $0x10] sm:$0xf]
  %v19 = vld [vmem:[%s0 + $0x14] sm:$0xf]
  %v20 = vld [vmem:[%s0 + $0x18] sm:$0xf]
  %v21 = vld [vmem:[%s0 + $0x1c] sm:$0xf]
  %v22 = vld [vmem:[%s0 + $0x20] sm:$0xf]
  %v23 = vld [vmem:[%s0 + $0x24] sm:$0xf]
  %v24 = vld [vmem:[%s0 + $0x28] sm:$0xf]
  %v25 = vld [vmem:[%s0 + $0x2c] sm:$0xf]
  %v26 = vld [vmem:[%s0 + $0x30] sm:$0xf]
  %v27 = vld [vmem:[%s0 + $0x34] sm:$0xf]
  %v28 = vld [vmem:[%s0 + $0x38] sm:$0xf]
  %v29 = vld [vmem:[%s0 + $0x3c] sm:$0xf]
  %v30 = vld [vmem:[%s0 + $0x40] sm:$0xf]
  %v31 = vld [vmem:[%s0 + $0x44] sm:$0xf]
  %v32 = vld [vmem:[%s0 + $0x48] sm:$0xf]
  %v33 = vld [vmem:[%s0 + $0x4c] sm:$0xf]
  %v34 = vld [vmem:[%s0 + $0x50] sm:$0xf]
  %v35 = vld [vmem:[%s0 + $0x54] sm:$0xf]
  %v36 = vld [vmem:[%s0 + $0x58] sm:$0xf]
  %v37 = vld [vmem:[%s0 + $0x5c] sm:$0xf]
  %v38 = vld [vmem:[%s0 + $0x60] sm:$0xf]
  %v39 = vld [vmem:[%s0 + $0x64] sm:$0xf]
  %v40 = vld [vmem:[%s0 + $0x68] sm:$0xf]
  %v41 = vld [vmem:[%s0 + $0x6c] sm:$0xf]
  %v42 = vld [vmem:[%s0 + $0x70] sm:$0xf]
  %v43 = vld [vmem:[%s0 + $0x74] sm:$0xf]
  %v44 = vld [vmem:[%s0 + $0x78] sm:$0xf]
  %v45 = vld [vmem:[%s0 + $0x7c] sm:$0xf]
  %v46 = vld [vmem:[%s1] sm:$0xf]
  %v47 = vld [vmem:[%s1 + $0x4] sm:$0xf]
  %v80 = vunpack.c.l.b16 %v14
  %v81 = vunpack.c.l.b16 %v15
  %v82 = vunpack.c.l.b16 %v16
  %v83 = vunpack.c.l.b16 %v17
  %v84 = vunpack.c.l.b16 %v18
  %v85 = vunpack.c.l.b16 %v19
  %v86 = vunpack.c.l.b16 %v20
  %v87 = vunpack.c.l.b16 %v21
  %v88 = vunpack.c.l.b16 %v22
  %v89 = vunpack.c.l.b16 %v23
  %v90 = vunpack.c.l.b16 %v24
  %v91 = vunpack.c.l.b16 %v25
  %v92 = vunpack.c.l.b16 %v26
  %v93 = vunpack.c.l.b16 %v27
  %v94 = vunpack.c.l.b16 %v28
  %v95 = vunpack.c.l.b16 %v29
  %v96 = vunpack.c.l.b16 %v30
  %v97 = vunpack.c.l.b16 %v31
  %v98 = vunpack.c.l.b16 %v32
  %v99 = vunpack.c.l.b16 %v33
  %v100 = vunpack.c.l.b16 %v34
  %v101 = vunpack.c.l.b16 %v35
  %v102 = vunpack.c.l.b16 %v36
  %v103 = vunpack.c.l.b16 %v37
  %v104 = vunpack.c.l.b16 %v38
  %v105 = vunpack.c.l.b16 %v39
  %v106 = vunpack.c.l.b16 %v40
  %v107 = vunpack.c.l.b16 %v41
  %v108 = vunpack.c.l.b16 %v42
  %v109 = vunpack.c.l.b16 %v43
  %v110 = vunpack.c.l.b16 %v44
  %v111 = vunpack.c.l.b16 %v45
  %v112 = vpack.c.b16 %v81, %v80
  %v113 = vpack.c.b16 %v83, %v82
  %v114 = vpack.c.b16 %v85, %v84
  %v115 = vpack.c.b16 %v87, %v86
  %v116 = vpack.c.b16 %v89, %v88
  %v117 = vpack.c.b16 %v91, %v90
  %v118 = vpack.c.b16 %v93, %v92
  %v119 = vpack.c.b16 %v95, %v94
  %v120 = vpack.c.b16 %v97, %v96
  %v121 = vpack.c.b16 %v99, %v98
  %v122 = vpack.c.b16 %v101, %v100
  %v123 = vpack.c.b16 %v103, %v102
  %v124 = vpack.c.b16 %v105, %v104
  %v125 = vpack.c.b16 %v107, %v106
  %v126 = vpack.c.b16 %v109, %v108
  %v127 = vpack.c.b16 %v111, %v110
  %v130 = vunpack.c.l.b16 %v46
  %v131 = vunpack.c.l.b16 %v47
  %v132 = vpack.c.b16 %v131, %v130
  %vm134 = vcmask 130048
  %v136 = vsel %vm134, %v112, 0
  %v139 = vsel %vm134, %v113, 0
  %v142 = vsel %vm134, %v114, 0
  %v145 = vsel %vm134, %v115, 0
  %v148 = vsel %vm134, %v116, 0
  %v151 = vsel %vm134, %v117, 0
  %v154 = vsel %vm134, %v118, 0
  %v157 = vsel %vm134, %v119, 0
  %v160 = vsel %vm134, %v120, 0
  %v163 = vsel %vm134, %v121, 0
  %v166 = vsel %vm134, %v122, 0
  %v169 = vsel %vm134, %v123, 0
  %v172 = vsel %vm134, %v124, 0
  %v175 = vsel %vm134, %v125, 0
  %v178 = vsel %vm134, %v126, 0
  %v181 = vsel %vm134, %v127, 0
  %183 = vmatprep.subr.bf16.mxu0 0
  %184 = vmatpush1.bf16.msra.mxu0 %v132
  %185 = vmatprep.subr.bf16.mxu0 0
  %186 = vmatpush1.bf16.msra.mxu0 0
  %187 = vmatprep.subr.bf16.mxu0 0
  %188 = vmatpush1.bf16.msra.mxu0 0
  %189 = vmatprep.subr.bf16.mxu0 0
  %190 = vmatpush1.bf16.msra.mxu0 0
  %191 = vmatprep.subr.bf16.mxu0 0
  %192 = vmatpush1.bf16.msra.mxu0 0
  %193 = vmatprep.subr.bf16.mxu0 0
  %194 = vmatpush1.bf16.msra.mxu0 0
  %195 = vmatprep.subr.bf16.mxu0 0
  %196 = vmatpush1.bf16.msra.mxu0 0
  %197 = vmatprep.subr.bf16.mxu0 0
  %198 = vmatpush1.bf16.msra.mxu0 0
  %199 = vmatprep.subr.bf16.mxu0 0
  %200 = vmatpush1.bf16.msra.mxu0 0
  %201 = vmatprep.subr.bf16.mxu0 0
  %202 = vmatpush1.bf16.msra.mxu0 0
  %203 = vmatprep.subr.bf16.mxu0 0
  %204 = vmatpush1.bf16.msra.mxu0 0
  %205 = vmatprep.subr.bf16.mxu0 0
  %206 = vmatpush1.bf16.msra.mxu0 0
  %207 = vmatprep.subr.bf16.mxu0 0
  %208 = vmatpush1.bf16.msra.mxu0 0
  %209 = vmatprep.subr.bf16.mxu0 0
  %210 = vmatpush1.bf16.msra.mxu0 0
  %211 = vmatprep.subr.bf16.mxu0 0
  %212 = vmatpush1.bf16.msra.mxu0 0
  %213 = vmatprep.subr.bf16.mxu0 0
  %214 = vmatpush1.bf16.msra.mxu0 0
  %215 = vmatprep.mubr.bf16.mxu0 0
  %216 = vmatmul.mubr.bf16.gmra.mrb[0].mxu0 %v136
  %v217 = vpop.f32.mrb[0].mxu0
  %v218 = vadd.f32 0.0, %v217
  %v219 = vpop.f32.mrb[0].mxu0
  %v220 = vpop.f32.mrb[0].mxu0
  %v221 = vadd.f32 0.0, %v220
  %v222 = vpop.f32.mrb[0].mxu0
  %223 = vmatprep.mubr.bf16.mxu0 0
  %224 = vmatmul.mubr.bf16.gmra.mrb[0].mxu0 %v139
  %v225 = vpop.f32.mrb[0].mxu0
  %v226 = vadd.f32 0.0, %v225
  %v227 = vpop.f32.mrb[0].mxu0
  %v228 = vpop.f32.mrb[0].mxu0
  %v229 = vadd.f32 0.0, %v228
  %v230 = vpop.f32.mrb[0].mxu0
  %231 = vmatprep.mubr.bf16.mxu0 0
  %232 = vmatmul.mubr.bf16.gmra.mrb[0].mxu0 %v142
  %v233 = vpop.f32.mrb[0].mxu0
  %v234 = vadd.f32 0.0, %v233
  %v235 = vpop.f32.mrb[0].mxu0
  %v236 = vpop.f32.mrb[0].mxu0
  %v237 = vadd.f32 0.0, %v236
  %v238 = vpop.f32.mrb[0].mxu0
  %239 = vmatprep.mubr.bf16.mxu0 0
  %240 = vmatmul.mubr.bf16.gmra.mrb[0].mxu0 %v145
  %v241 = vpop.f32.mrb[0].mxu0
  %v242 = vadd.f32 0.0, %v241
  %v243 = vpop.f32.mrb[0].mxu0
  %v244 = vpop.f32.mrb[0].mxu0
  %v245 = vadd.f32 0.0, %v244
  %v246 = vpop.f32.mrb[0].mxu0
  %247 = vmatprep.mubr.bf16.mxu0 0
  %248 = vmatmul.mubr.bf16.gmra.mrb[0].mxu0 %v148
  %v249 = vpop.f32.mrb[0].mxu0
  %v250 = vadd.f32 0.0, %v249
  %v251 = vpop.f32.mrb[0].mxu0
  %v252 = vpop.f32.mrb[0].mxu0
  %v253 = vadd.f32 0.0, %v252
  %v254 = vpop.f32.mrb[0].mxu0
  %255 = vmatprep.mubr.bf16.mxu0 0
  %256 = vmatmul.mubr.bf16.gmra.mrb[0].mxu0 %v151
  %v257 = vpop.f32.mrb[0].mxu0
  %v258 = vadd.f32 0.0, %v257
  %v259 = vpop.f32.mrb[0].mxu0
  %v260 = vpop.f32.mrb[0].mxu0
  %v261 = vadd.f32 0.0, %v260
  %v262 = vpop.f32.mrb[0].mxu0
  %263 = vmatprep.mubr.bf16.mxu0 0
  %264 = vmatmul.mubr.bf16.gmra.mrb[0].mxu0 %v154
  %v265 = vpop.f32.mrb[0].mxu0
  %v266 = vadd.f32 0.0, %v265
  %v267 = vpop.f32.mrb[0].mxu0
  %v268 = vpop.f32.mrb[0].mxu0
  %v269 = vadd.f32 0.0, %v268
  %v270 = vpop.f32.mrb[0].mxu0
  %271 = vmatprep.mubr.bf16.mxu0 0
  %272 = vmatmul.mubr.bf16.gmra.mrb[0].mxu0 %v157
  %v273 = vpop.f32.mrb[0].mxu0
  %v274 = vadd.f32 0.0, %v273
  %v275 = vpop.f32.mrb[0].mxu0
  %v276 = vpop.f32.mrb[0].mxu0
  %v277 = vadd.f32 0.0, %v276
  %v278 = vpop.f32.mrb[0].mxu0
  %279 = vmatprep.mubr.bf16.mxu0 0
  %280 = vmatmul.mubr.bf16.gmra.mrb[0].mxu0 %v160
  %v281 = vpop.f32.mrb[0].mxu0
  %v282 = vadd.f32 0.0, %v281
  %v283 = vpop.f32.mrb[0].mxu0
  %v284 = vpop.f32.mrb[0].mxu0
  %v285 = vadd.f32 0.0, %v284
  %v286 = vpop.f32.mrb[0].mxu0
  %287 = vmatprep.mubr.bf16.mxu0 0
  %288 = vmatmul.mubr.bf16.gmra.mrb[0].mxu0 %v163
  %v289 = vpop.f32.mrb[0].mxu0
  %v290 = vadd.f32 0.0, %v289
  %v291 = vpop.f32.mrb[0].mxu0
  %v292 = vpop.f32.mrb[0].mxu0
  %v293 = vadd.f32 0.0, %v292
  %v294 = vpop.f32.mrb[0].mxu0
  %295 = vmatprep.mubr.bf16.mxu0 0
  %296 = vmatmul.mubr.bf16.gmra.mrb[0].mxu0 %v166
  %v297 = vpop.f32.mrb[0].mxu0
  %v298 = vadd.f32 0.0, %v297
  %v299 = vpop.f32.mrb[0].mxu0
  %v300 = vpop.f32.mrb[0].mxu0
  %v301 = vadd.f32 0.0, %v300
  %v302 = vpop.f32.mrb[0].mxu0
  %303 = vmatprep.mubr.bf16.mxu0 0
  %304 = vmatmul.mubr.bf16.gmra.mrb[0].mxu0 %v169
  %v305 = vpop.f32.mrb[0].mxu0
  %v306 = vadd.f32 0.0, %v305
  %v307 = vpop.f32.mrb[0].mxu0
  %v308 = vpop.f32.mrb[0].mxu0
  %v309 = vadd.f32 0.0, %v308
  %v310 = vpop.f32.mrb[0].mxu0
  %311 = vmatprep.mubr.bf16.mxu0 0
  %312 = vmatmul.mubr.bf16.gmra.mrb[0].mxu0 %v172
  %v313 = vpop.f32.mrb[0].mxu0
  %v314 = vadd.f32 0.0, %v313
  %v315 = vpop.f32.mrb[0].mxu0
  %v316 = vpop.f32.mrb[0].mxu0
  %v317 = vadd.f32 0.0, %v316
  %v318 = vpop.f32.mrb[0].mxu0
  %319 = vmatprep.mubr.bf16.mxu0 0
  %320 = vmatmul.mubr.bf16.gmra.mrb[0].mxu0 %v175
  %v321 = vpop.f32.mrb[0].mxu0
  %v322 = vadd.f32 0.0, %v321
  %v323 = vpop.f32.mrb[0].mxu0
  %v324 = vpop.f32.mrb[0].mxu0
  %v325 = vadd.f32 0.0, %v324
  %v326 = vpop.f32.mrb[0].mxu0
  %327 = vmatprep.mubr.bf16.mxu0 0
  %328 = vmatmul.mubr.bf16.gmra.mrb[0].mxu0 %v178
  %v329 = vpop.f32.mrb[0].mxu0
  %v330 = vadd.f32 0.0, %v329
  %v331 = vpop.f32.mrb[0].mxu0
  %v332 = vpop.f32.mrb[0].mxu0
  %v333 = vadd.f32 0.0, %v332
  %v334 = vpop.f32.mrb[0].mxu0
  %335 = vmatprep.mubr.bf16.mxu0 0
  %336 = vmatmul.mubr.bf16.gmra.mrb[0].mxu0 %v181
  %v337 = vpop.f32.mrb[0].mxu0
  %v338 = vadd.f32 0.0, %v337
  %v339 = vpop.f32.mrb[0].mxu0
  %v340 = vpop.f32.mrb[0].mxu0
  %v341 = vadd.f32 0.0, %v340
  %v342 = vpop.f32.mrb[0].mxu0
  %343 = vdwg.mxu0
  %v344 = vpack.c.bf16 %v221, %v218
  %v345 = vpack.c.bf16 %v229, %v226
  %v346 = vpack.c.bf16 %v237, %v234
  %v347 = vpack.c.bf16 %v245, %v242
  %v348 = vpack.c.bf16 %v253, %v250
  %v349 = vpack.c.bf16 %v261, %v258
  %v350 = vpack.c.bf16 %v269, %v266
  %v351 = vpack.c.bf16 %v277, %v274
  %v352 = vpack.c.bf16 %v285, %v282
  %v353 = vpack.c.bf16 %v293, %v290
  %v354 = vpack.c.bf16 %v301, %v298
  %v355 = vpack.c.bf16 %v309, %v306
  %v356 = vpack.c.bf16 %v317, %v314
  %v357 = vpack.c.bf16 %v325, %v322
  %v358 = vpack.c.bf16 %v333, %v330
  %v359 = vpack.c.bf16 %v341, %v338
  %v376 = vunpack.c.l.b16 %v344
  %v377 = vunpack.c.h.b16 %v344
  %v378 = vunpack.c.l.b16 %v345
  %v379 = vunpack.c.h.b16 %v345
  %v380 = vunpack.c.l.b16 %v346
  %v381 = vunpack.c.h.b16 %v346
  %v382 = vunpack.c.l.b16 %v347
  %v383 = vunpack.c.h.b16 %v347
  %v384 = vunpack.c.l.b16 %v348
  %v385 = vunpack.c.h.b16 %v348
  %v386 = vunpack.c.l.b16 %v349
  %v387 = vunpack.c.h.b16 %v349
  %v388 = vunpack.c.l.b16 %v350
  %v389 = vunpack.c.h.b16 %v350
  %v390 = vunpack.c.l.b16 %v351
  %v391 = vunpack.c.h.b16 %v351
  %v392 = vunpack.c.l.b16 %v352
  %v393 = vunpack.c.h.b16 %v352
  %v394 = vunpack.c.l.b16 %v353
  %v395 = vunpack.c.h.b16 %v353
  %v396 = vunpack.c.l.b16 %v354
  %v397 = vunpack.c.h.b16 %v354
  %v398 = vunpack.c.l.b16 %v355
  %v399 = vunpack.c.h.b16 %v355
  %v400 = vunpack.c.l.b16 %v356
  %v401 = vunpack.c.h.b16 %v356
  %v402 = vunpack.c.l.b16 %v357
  %v403 = vunpack.c.h.b16 %v357
  %v404 = vunpack.c.l.b16 %v358
  %v405 = vunpack.c.h.b16 %v358
  %v406 = vunpack.c.l.b16 %v359
  %v407 = vunpack.c.h.b16 %v359
  %v408 = vpack.c.b16 %v376, %v376
  %v409 = vpack.c.b16 %v377, %v377
  %v410 = vpack.c.b16 %v378, %v378
  %v411 = vpack.c.b16 %v379, %v379
  %v412 = vpack.c.b16 %v380, %v380
  %v413 = vpack.c.b16 %v381, %v381
  %v414 = vpack.c.b16 %v382, %v382
  %v415 = vpack.c.b16 %v383, %v383
  %v416 = vpack.c.b16 %v384, %v384
  %v417 = vpack.c.b16 %v385, %v385
  %v418 = vpack.c.b16 %v386, %v386
  %v419 = vpack.c.b16 %v387, %v387
  %v420 = vpack.c.b16 %v388, %v388
  %v421 = vpack.c.b16 %v389, %v389
  %v422 = vpack.c.b16 %v390, %v390
  %v423 = vpack.c.b16 %v391, %v391
  %v424 = vpack.c.b16 %v392, %v392
  %v425 = vpack.c.b16 %v393, %v393
  %v426 = vpack.c.b16 %v394, %v394
  %v427 = vpack.c.b16 %v395, %v395
  %v428 = vpack.c.b16 %v396, %v396
  %v429 = vpack.c.b16 %v397, %v397
  %v430 = vpack.c.b16 %v398, %v398
  %v431 = vpack.c.b16 %v399, %v399
  %v432 = vpack.c.b16 %v400, %v400
  %v433 = vpack.c.b16 %v401, %v401
  %v434 = vpack.c.b16 %v402, %v402
  %v435 = vpack.c.b16 %v403, %v403
  %v436 = vpack.c.b16 %v404, %v404
  %v437 = vpack.c.b16 %v405, %v405
  %v438 = vpack.c.b16 %v406, %v406
  %v439 = vpack.c.b16 %v407, %v407
  %472 = vst [vmem:[%s2] sm:$0xf] %v408
  %473 = vst [vmem:[%s2 + $0x4] sm:$0xf] %v409
  %474 = vst [vmem:[%s2 + $0x8] sm:$0xf] %v410
  %475 = vst [vmem:[%s2 + $0xc] sm:$0xf] %v411
  %476 = vst [vmem:[%s2 + $0x10] sm:$0xf] %v412
  %477 = vst [vmem:[%s2 + $0x14] sm:$0xf] %v413
  %478 = vst [vmem:[%s2 + $0x18] sm:$0xf] %v414
  %479 = vst [vmem:[%s2 + $0x1c] sm:$0xf] %v415
  %480 = vst [vmem:[%s2 + $0x20] sm:$0xf] %v416
  %481 = vst [vmem:[%s2 + $0x24] sm:$0xf] %v417
  %482 = vst [vmem:[%s2 + $0x28] sm:$0xf] %v418
  %483 = vst [vmem:[%s2 + $0x2c] sm:$0xf] %v419
  %484 = vst [vmem:[%s2 + $0x30] sm:$0xf] %v420
  %485 = vst [vmem:[%s2 + $0x34] sm:$0xf] %v421
  %486 = vst [vmem:[%s2 + $0x38] sm:$0xf] %v422
  %487 = vst [vmem:[%s2 + $0x3c] sm:$0xf] %v423
  %488 = vst [vmem:[%s2 + $0x40] sm:$0xf] %v424
  %489 = vst [vmem:[%s2 + $0x44] sm:$0xf] %v425
  %490 = vst [vmem:[%s2 + $0x48] sm:$0xf] %v426
  %491 = vst [vmem:[%s2 + $0x4c] sm:$0xf] %v427
  %492 = vst [vmem:[%s2 + $0x50] sm:$0xf] %v428
  %493 = vst [vmem:[%s2 + $0x54] sm:$0xf] %v429
  %494 = vst [vmem:[%s2 + $0x58] sm:$0xf] %v430
  %495 = vst [vmem:[%s2 + $0x5c] sm:$0xf] %v431
  %496 = vst [vmem:[%s2 + $0x60] sm:$0xf] %v432
  %497 = vst [vmem:[%s2 + $0x64] sm:$0xf] %v433
  %498 = vst [vmem:[%s2 + $0x68] sm:$0xf] %v434
  %499 = vst [vmem:[%s2 + $0x6c] sm:$0xf] %v435
  %500 = vst [vmem:[%s2 + $0x70] sm:$0xf] %v436
  %501 = vst [vmem:[%s2 + $0x74] sm:$0xf] %v437
  %502 = vst [vmem:[%s2 + $0x78] sm:$0xf] %v438
  %503 = vst [vmem:[%s2 + $0x7c] sm:$0xf] %v439
  %v504 = vadd.f32 %v218, %v221
  %v505 = vadd.f32 %v504, %v226
  %v506 = vadd.f32 %v505, %v229
  %v507 = vadd.f32 %v506, %v234
  %v508 = vadd.f32 %v507, %v237
  %v509 = vadd.f32 %v508, %v242
  %v510 = vadd.f32 %v509, %v245
  %v511 = vadd.f32 %v510, %v250
  %v512 = vadd.f32 %v511, %v253
  %v513 = vadd.f32 %v512, %v258
  %v514 = vadd.f32 %v513, %v261
  %v515 = vadd.f32 %v514, %v266
  %v516 = vadd.f32 %v515, %v269
  %v517 = vadd.f32 %v516, %v274
  %v518 = vadd.f32 %v517, %v277
  %v519 = vadd.f32 %v518, %v282
  %v520 = vadd.f32 %v519, %v285
  %v521 = vadd.f32 %v520, %v290
  %v522 = vadd.f32 %v521, %v293
  %v523 = vadd.f32 %v522, %v298
  %v524 = vadd.f32 %v523, %v301
  %v525 = vadd.f32 %v524, %v306
  %v526 = vadd.f32 %v525, %v309
  %v527 = vadd.f32 %v526, %v314
  %v528 = vadd.f32 %v527, %v317
  %v529 = vadd.f32 %v528, %v322
  %v530 = vadd.f32 %v529, %v325
  %v531 = vadd.f32 %v530, %v330
  %v532 = vadd.f32 %v531, %v333
  %v533 = vadd.f32 %v532, %v338
  %v534 = vadd.f32 %v533, %v341
  %v535 = vrot.slane %v534, 4
  %v536 = vadd.f32 %v534, %v535
  %v537 = vrot.slane %v536, 2
  %v538 = vadd.f32 %v536, %v537
  %v539 = vrot.slane %v538, 1
  %v540 = vadd.f32 %v538, %v539
  %541 = vst [vmem:[%s3] sm:$0x1] %v540
  %v542 = vmul.f32 %v218, %v218
  %v543 = vmul.f32 %v221, %v221
  %v544 = vmul.f32 %v226, %v226
  %v545 = vmul.f32 %v229, %v229
  %v546 = vmul.f32 %v234, %v234
  %v547 = vmul.f32 %v237, %v237
  %v548 = vmul.f32 %v242, %v242
  %v549 = vmul.f32 %v245, %v245
  %v550 = vmul.f32 %v250, %v250
  %v551 = vmul.f32 %v253, %v253
  %v552 = vmul.f32 %v258, %v258
  %v553 = vmul.f32 %v261, %v261
  %v554 = vmul.f32 %v266, %v266
  %v555 = vmul.f32 %v269, %v269
  %v556 = vmul.f32 %v274, %v274
  %v557 = vmul.f32 %v277, %v277
  %v558 = vmul.f32 %v282, %v282
  %v559 = vmul.f32 %v285, %v285
  %v560 = vmul.f32 %v290, %v290
  %v561 = vmul.f32 %v293, %v293
  %v562 = vmul.f32 %v298, %v298
  %v563 = vmul.f32 %v301, %v301
  %v564 = vmul.f32 %v306, %v306
  %v565 = vmul.f32 %v309, %v309
  %v566 = vmul.f32 %v314, %v314
  %v567 = vmul.f32 %v317, %v317
  %v568 = vmul.f32 %v322, %v322
  %v569 = vmul.f32 %v325, %v325
  %v570 = vmul.f32 %v330, %v330
  %v571 = vmul.f32 %v333, %v333
  %v572 = vmul.f32 %v338, %v338
  %v573 = vmul.f32 %v341, %v341
  %v574 = vadd.f32 %v542, %v543
  %v575 = vadd.f32 %v574, %v544
  %v576 = vadd.f32 %v575, %v545
  %v577 = vadd.f32 %v576, %v546
  %v578 = vadd.f32 %v577, %v547
  %v579 = vadd.f32 %v578, %v548
  %v580 = vadd.f32 %v579, %v549
  %v581 = vadd.f32 %v580, %v550
  %v582 = vadd.f32 %v581, %v551
  %v583 = vadd.f32 %v582, %v552
  %v584 = vadd.f32 %v583, %v553
  %v585 = vadd.f32 %v584, %v554
  %v586 = vadd.f32 %v585, %v555
  %v587 = vadd.f32 %v586, %v556
  %v588 = vadd.f32 %v587, %v557
  %v589 = vadd.f32 %v588, %v558
  %v590 = vadd.f32 %v589, %v559
  %v591 = vadd.f32 %v590, %v560
  %v592 = vadd.f32 %v591, %v561
  %v593 = vadd.f32 %v592, %v562
  %v594 = vadd.f32 %v593, %v563
  %v595 = vadd.f32 %v594, %v564
  %v596 = vadd.f32 %v595, %v565
  %v597 = vadd.f32 %v596, %v566
  %v598 = vadd.f32 %v597, %v567
  %v599 = vadd.f32 %v598, %v568
  %v600 = vadd.f32 %v599, %v569
  %v601 = vadd.f32 %v600, %v570
  %v602 = vadd.f32 %v601, %v571
  %v603 = vadd.f32 %v602, %v572
  %v604 = vadd.f32 %v603, %v573
  %v605 = vrot.slane %v604, 4
  %v606 = vadd.f32 %v604, %v605
  %v607 = vrot.slane %v606, 2
  %v608 = vadd.f32 %v606, %v607
  %v609 = vrot.slane %v608, 1
  %v610 = vadd.f32 %v608, %v609
  %611 = vst [vmem:[%s3 + $0x1] sm:$0x1] %v610
  // Predicated region
  $region10: #{deconv_block_forward.4} parent=0 // pred_check
    _
  $region11: #{deconv_block_forward.4} parent=0 // pred_check_branch
    %613 = sbr.rel (0) target = $region13
  $region12: #{deconv_block_forward.4} parent=0 // pred_region
    _
  $region13: #{deconv_block_forward.4} parent=0 // pred_fallthru
    _
  // Predicated region
  $region14: #{deconv_block_forward.4} parent=0 // pred_check
    _
  $region15: #{deconv_block_forward.4} parent=0 // pred_check_branch
    %615 = sbr.rel (0) target = $region17
  $region16: #{deconv_block_forward.4} parent=0 // pred_region
    _
  $region17: #{deconv_block_forward.4} parent=0 // pred_fallthru
    _
  // Predicated region
  $region18: #{deconv_block_forward.4} parent=0 // pred_check
    _
  $region19: #{deconv_block_forward.4} parent=0 // pred_check_branch
    %617 = sbr.rel (0) target = $region21
  $region20: #{deconv_block_forward.4} parent=0 // pred_region
    _
  $region21: #{deconv_block_forward.4} parent=0 // pred_fallthru
    _
  // Predicated region
  $region22: #{deconv_block_forward.4} parent=0 // pred_check
    _
  $region23: #{deconv_block_forward.4} parent=0 // pred_check_branch
    %619 = sbr.rel (0) target = $region25
  $region24: #{deconv_block_forward.4} parent=0 // pred_region
    _
  $region25: #{deconv_block_forward.4} parent=0 // pred_fallthru
    _

// kernel: deconv_block_forward.6
$region0: #{deconv_block_forward.6}
  #allocation0 [shape = 'u32[]', space=smem, size = 0x4, offset = 0x4, fixed_abs, tag = 'smem constant byte address 0x4 - core index']
  #allocation1 [shape = 'u32[144,128]{1,0:T(1,128)}', space=vmem, size = 0x12000, scoped, tag = 'internal scratch']
  %s0 = inlined_call_operand.vmem [shape: bf16[512,36], index: 0, kind: input, shape index: {}]
  %s1 = inlined_call_operand.vmem [shape: bf16[512,36], index: 1, kind: input, shape index: {}]
  %s2 = inlined_call_operand.vmem [shape: bf16[36,128], index: 2, kind: input, shape index: {}]
  %s3 = inlined_call_operand.vmem [shape: bf16[36,128], index: 3, kind: input, shape index: {}]
  %s4 = inlined_call_operand.vmem [shape: bf16[512,128], index: 4, kind: output, shape index: {0}]
  %s5 = inlined_call_operand.vmem [shape: f32[16,128], index: 5, kind: output, shape index: {1}]
  %6 = xla_tuple %s4, %s5
  %s7 = sld [smem:[#allocation0]]
  $region57: #{deconv_block_forward.6} parent=0
    _
  %s9 = ssub.s32 1, %s7
  %s10 = scalar_select 0, %s9, %s7
  loop: start=0, step=1, limit=4
  $region2: #{deconv_block_forward.6} parent=0 // loop_pre_header
    _
  $region3: #{deconv_block_forward.6} parent=0 // loop_header
    %s12 = sphi 0, %s16
    %p13 = scmp.ge.s32.totalorder %s12, 4
    %s22 = sphi 0, %s24
    %s25 = sphi 0, %s22
    %s26 = sphi 0, %s25
    %s42 = sphi 0, %s26
    %s48 = sphi 0, %s50
    %s51 = sphi 0, %s48
    %s52 = sphi 0, %s51
    %s68 = sphi 0, %s52
    %s72 = sphi 0, %s72
    %s74 = sphi 0, %s72
    %s75 = sphi 0, %s74
    %s89 = sphi 0, %s75
    %s93 = sphi 0, %s93
    %s95 = sphi 0, %s93
    %s96 = sphi 0, %s95
    %s110 = sphi 0, %s96
    %s116 = sphi 0, %s118
    %s119 = sphi 0, %s116
    %s120 = sphi 0, %s119
    %s136 = sphi 0, %s120
    %s142 = sphi 0, %s144
    %s145 = sphi 0, %s142
    %s146 = sphi 0, %s145
    %s162 = sphi 0, %s146
  $region4: #{deconv_block_forward.6} parent=0 // loop_header_branch
    %15 = sbr.rel (%p13) target = $region8
  $region5: #{deconv_block_forward.6} parent=0 // loop_body
    %s17 = ssub.s32 %s12, 1
    %s18 = ssub.s32 %s12, 2
    %s19 = sadd.s32 %s12, 1
    %s20 = ssub.s32 %s12, %s19
    %p21 = scmp.eq.s32.totalorder %s20, 0
    %s23 = sadd.s32 %s22, 1
    %s24 = scalar_select %p21, %s22, %s23
    %p27 = pneg %p21
    %p28 = scmp.eq.s32.totalorder %s12, 1
    %p29 = por %p27, %p28
    %p30 = scmp.ne.s32.totalorder %s22, %s25
    %p31 = scmp.eq.s32.totalorder %s12, 0
    %p32 = por %p30, %p31
    %p33 = scmp.ne.s32.totalorder %s22, %s25
    %p34 = scmp.eq.s32.totalorder %s17, 1
    %p35 = por %p33, %p34
    %p36 = scmp.ne.s32.totalorder %s25, %s26
    %p37 = scmp.eq.s32.totalorder %s17, 0
    %p38 = por %p36, %p37
    %p39 = scmp.ne.s32.totalorder %s25, %s26
    %p40 = scmp.eq.s32.totalorder %s18, 1
    %p41 = por %p39, %p40
    %p43 = scmp.ne.s32.totalorder %s26, %s42
    %p44 = scmp.eq.s32.totalorder %s18, 0
    %p45 = por %p43, %p44
    %s46 = ssub.s32 %s12, %s19
    %p47 = scmp.eq.s32.totalorder %s46, 0
    %s49 = sadd.s32 %s48, 1
    %s50 = scalar_select %p47, %s48, %s49
    %p53 = pneg %p47
    %p54 = scmp.eq.s32.totalorder %s12, 1
    %p55 = por %p53, %p54
    %p56 = scmp.ne.s32.totalorder %s48, %s51
    %p57 = scmp.eq.s32.totalorder %s12, 0
    %p58 = por %p56, %p57
    %p59 = scmp.ne.s32.totalorder %s48, %s51
    %p60 = scmp.eq.s32.totalorder %s17, 1
    %p61 = por %p59, %p60
    %p62 = scmp.ne.s32.totalorder %s51, %s52
    %p63 = scmp.eq.s32.totalorder %s17, 0
    %p64 = por %p62, %p63
    %p65 = scmp.ne.s32.totalorder %s51, %s52
    %p66 = scmp.eq.s32.totalorder %s18, 1
    %p67 = por %p65, %p66
    %p69 = scmp.ne.s32.totalorder %s52, %s68
    %p70 = scmp.eq.s32.totalorder %s18, 0
    %p71 = por %p69, %p70
    %s73 = sadd.s32 %s72, 1
    %p76 = scmp.eq.s32.totalorder %s12, 1
    %p77 = scmp.ne.s32.totalorder %s72, %s74
    %p78 = scmp.eq.s32.totalorder %s12, 0
    %p79 = por %p77, %p78
    %p80 = scmp.ne.s32.totalorder %s72, %s74
    %p81 = scmp.eq.s32.totalorder %s17, 1
    %p82 = por %p80, %p81
    %p83 = scmp.ne.s32.totalorder %s74, %s75
    %p84 = scmp.eq.s32.totalorder %s17, 0
    %p85 = por %p83, %p84
    %p86 = scmp.ne.s32.totalorder %s74, %s75
    %p87 = scmp.eq.s32.totalorder %s18, 1
    %p88 = por %p86, %p87
    %p90 = scmp.ne.s32.totalorder %s75, %s89
    %p91 = scmp.eq.s32.totalorder %s18, 0
    %p92 = por %p90, %p91
    %s94 = sadd.s32 %s93, 1
    %p97 = scmp.eq.s32.totalorder %s12, 1
    %p98 = scmp.ne.s32.totalorder %s93, %s95
    %p99 = scmp.eq.s32.totalorder %s12, 0
    %p100 = por %p98, %p99
    %p101 = scmp.ne.s32.totalorder %s93, %s95
    %p102 = scmp.eq.s32.totalorder %s17, 1
    %p103 = por %p101, %p102
    %p104 = scmp.ne.s32.totalorder %s95, %s96
    %p105 = scmp.eq.s32.totalorder %s17, 0
    %p106 = por %p104, %p105
    %p107 = scmp.ne.s32.totalorder %s95, %s96
    %p108 = scmp.eq.s32.totalorder %s18, 1
    %p109 = por %p107, %p108
    %p111 = scmp.ne.s32.totalorder %s96, %s110
    %p112 = scmp.eq.s32.totalorder %s18, 0
    %p113 = por %p111, %p112
    %s114 = ssub.s32 %s12, %s19
    %p115 = scmp.eq.s32.totalorder %s114, 0
    %s117 = sadd.s32 %s116, 1
    %s118 = scalar_select %p115, %s116, %s117
    %p121 = pneg %p115
    %p122 = scmp.eq.s32.totalorder %s12, 1
    %p123 = por %p121, %p122
    %p124 = scmp.ne.s32.totalorder %s116, %s119
    %p125 = scmp.eq.s32.totalorder %s12, 0
    %p126 = por %p124, %p125
    %p127 = scmp.ne.s32.totalorder %s116, %s119
    %p128 = scmp.eq.s32.totalorder %s17, 1
    %p129 = por %p127, %p128
    %p130 = scmp.ne.s32.totalorder %s119, %s120
    %p131 = scmp.eq.s32.totalorder %s17, 0
    %p132 = por %p130, %p131
    %p133 = scmp.ne.s32.totalorder %s119, %s120
    %p134 = scmp.eq.s32.totalorder %s18, 1
    %p135 = por %p133, %p134
    %p137 = scmp.ne.s32.totalorder %s120, %s136
    %p138 = scmp.eq.s32.totalorder %s18, 0
    %p139 = por %p137, %p138
    %s140 = ssub.s32 %s12, %s19
    %p141 = scmp.eq.s32.totalorder %s140, 0
    %s143 = sadd.s32 %s142, 1
    %s144 = scalar_select %p141, %s142, %s143
    %p147 = pneg %p141
    %p148 = scmp.eq.s32.totalorder %s12, 1
    %p149 = por %p147, %p148
    %p150 = scmp.ne.s32.totalorder %s142, %s145
    %p151 = scmp.eq.s32.totalorder %s12, 0
    %p152 = por %p150, %p151
    %p153 = scmp.ne.s32.totalorder %s142, %s145
    %p154 = scmp.eq.s32.totalorder %s17, 1
    %p155 = por %p153, %p154
    %p156 = scmp.ne.s32.totalorder %s145, %s146
    %p157 = scmp.eq.s32.totalorder %s17, 0
    %p158 = por %p156, %p157
    %p159 = scmp.ne.s32.totalorder %s145, %s146
    %p160 = scmp.eq.s32.totalorder %s18, 1
    %p161 = por %p159, %p160
    %p163 = scmp.ne.s32.totalorder %s146, %s162
    %p164 = scmp.eq.s32.totalorder %s18, 0
    %p165 = por %p163, %p164
    %p166 = scmp.le.s32.totalorder 1, %s12
    %p167 = scmp.lt.s32.totalorder %s12, 3
    %p168 = pnand %p166, %p167
    %p169 = pneg %p168
    // Predicated region
    $region9: #{deconv_block_forward.6} parent=5 // pred_check
      _
    $region10: #{deconv_block_forward.6} parent=5 // pred_check_branch
      %171 = sbr.rel (%p168) target = $region12
    $region11: #{deconv_block_forward.6} parent=5 // pred_region
      %s172 = ssub.s32 %s12, 1
      // Predicated region
      $region13: #{deconv_block_forward.6} parent=11 // pred_check
        %p173 = pneg %p85
      $region14: #{deconv_block_forward.6} parent=11 // pred_check_branch
        %175 = sbr.rel (%p173) target = $region16
      $region15: #{deconv_block_forward.6} parent=11 // pred_region
        _
      $region16: #{deconv_block_forward.6} parent=11 // pred_fallthru
        _
      // Predicated region
      $region17: #{deconv_block_forward.6} parent=11 // pred_check
        %p176 = pneg %p106
      $region18: #{deconv_block_forward.6} parent=11 // pred_check_branch
        %178 = sbr.rel (%p176) target = $region20
      $region19: #{deconv_block_forward.6} parent=11 // pred_region
        _
      $region20: #{deconv_block_forward.6} parent=11 // pred_fallthru
        _
    $region12: #{deconv_block_forward.6} parent=5 // pred_fallthru
      _
    %p179 = scmp.lt.s32.totalorder %s12, 2
    // Predicated region
    $region21: #{deconv_block_forward.6} parent=5 // pred_check
      %p180 = pneg %p179
    $region22: #{deconv_block_forward.6} parent=5 // pred_check_branch
      %182 = sbr.rel (%p180) target = $region24
    $region23: #{deconv_block_forward.6} parent=5 // pred_region
      // Predicated region
      $region25: #{deconv_block_forward.6} parent=23 // pred_check
        %p183 = pneg %p32
      $region26: #{deconv_block_forward.6} parent=23 // pred_check_branch
        %185 = sbr.rel (%p183) target = $region28
      $region27: #{deconv_block_forward.6} parent=23 // pred_region
        %s186 = smul.u32 32, %s12
        %p187 = scmp.lt.s32.totalorder %s186, 63
        %s188 = scalar_select %p187, %s186, 63
        %s189 = smul.addr %s188, 4
        %s190 = scalar_lea.vmem %s0, %s189
        %s191 = smul.u32 32, %s12
      $region28: #{deconv_block_forward.6} parent=23 // pred_fallthru
        _
      // Predicated region
      $region29: #{deconv_block_forward.6} parent=23 // pred_check
        %p192 = pneg %p58
      $region30: #{deconv_block_forward.6} parent=23 // pred_check_branch
        %194 = sbr.rel (%p192) target = $region32
      $region31: #{deconv_block_forward.6} parent=23 // pred_region
        %s195 = smul.u32 32, %s12
        %p196 = scmp.lt.s32.totalorder %s195, 63
        %s197 = scalar_select %p196, %s195, 63
        %s198 = smul.addr %s197, 4
        %s199 = scalar_lea.vmem %s1, %s198
        %s200 = smul.u32 32, %s12
      $region32: #{deconv_block_forward.6} parent=23 // pred_fallthru
        _
    $region24: #{deconv_block_forward.6} parent=5 // pred_fallthru
      _
    %p201 = scmp.le.s32.totalorder 1, %s12
    %p202 = scmp.lt.s32.totalorder %s12, 3
    %p203 = pnand %p201, %p202
    %p204 = pneg %p203
    // Predicated region
    $region33: #{deconv_block_forward.6} parent=5 // pred_check
      _
    $region34: #{deconv_block_forward.6} parent=5 // pred_check_branch
      %206 = sbr.rel (%p203) target = $region36
    $region35: #{deconv_block_forward.6} parent=5 // pred_region
      %s207 = ssub.s32 %s12, 1
      %s208 = smul.u32 32, %s17
      %p209 = scmp.lt.s32.totalorder %s208, 63
      %s210 = scalar_select %p209, %s208, 63
      %s211 = smul.addr %s210, 4
      %s212 = scalar_lea.vmem %s0, %s211
      %p213 = pneg %p38
      %p214 = pneg %p35
      %s215 = smul.u32 32, %s17
      %p216 = scmp.lt.s32.totalorder %s215, 63
      %s217 = scalar_select %p216, %s215, 63
      %s218 = smul.addr %s217, 4
      %s219 = scalar_lea.vmem %s1, %s218
      %p220 = pneg %p64
      %p221 = pneg %p61
      %p222 = pneg %p85
      %p223 = pneg %p82
      %p224 = pneg %p106
      %p225 = pneg %p103
      %p226 = pneg %p132
      %p227 = pneg %p129
      %s228 = smul.u32 32, %s17
      %p229 = scmp.lt.s32.totalorder %s228, 63
      %s230 = scalar_select %p229, %s228, 63
      %s231 = smul.addr %s230, 4
      %s232 = scalar_lea.vmem %s4, %s231
      %p233 = pneg %p158
      %p234 = pneg %p155
      %p235 = scmp.lt.s32.totalorder %s17, 1
      %s236 = scalar_select %p235, %s17, 1
      %s237 = smul.addr %s236, 8
      %s238 = scalar_lea.vmem %s5, %s237
      %s239 = smul.u32 32, %s17
      %p240 = scmp.lt.s32.totalorder %s239, 63
      %s241 = scalar_select %p240, %s239, 63
      %s242 = smul.addr %s241, 4
      %s243 = scalar_lea.vmem %s0, %s242
      %s244 = smul.u32 32, %s17
      %s245 = smul.u32 32, %s17
      %p246 = scmp.lt.s32.totalorder %s245, 63
      %s247 = scalar_select %p246, %s245, 63
      %s248 = smul.addr %s247, 4
      %s249 = scalar_lea.vmem %s1, %s248
      %s250 = smul.u32 32, %s17
      %s251 = smul.u32 32, %s17
      %p252 = scmp.lt.s32.totalorder %s251, 63
      %s253 = scalar_select %p252, %s251, 63
      %s254 = smul.addr %s253, 4
      %s255 = scalar_lea.vmem %s4, %s254
      %s256 = smul.u32 32, %s17
      %p257 = scmp.lt.s32.totalorder %s17, 1
      %s258 = scalar_select %p257, %s17, 1
      %s259 = smul.addr %s258, 8
      %s260 = scalar_lea.vmem %s5, %s259
      %v262 = vld [vmem:[%s243] sm:$0xf]
      %v263 = vld [vmem:[%s243 + $0x4] sm:$0xf]
      %v264 = vld [vmem:[%s243 + $0x8] sm:$0xf]
      %v265 = vld [vmem:[%s243 + $0xc] sm:$0xf]
      %v266 = vld [vmem:[%s243 + $0x10] sm:$0xf]
      %v267 = vld [vmem:[%s243 + $0x14] sm:$0xf]
      %v268 = vld [vmem:[%s243 + $0x18] sm:$0xf]
      %v269 = vld [vmem:[%s243 + $0x1c] sm:$0xf]
      %v270 = vld [vmem:[%s243 + $0x20] sm:$0xf]
      %v271 = vld [vmem:[%s243 + $0x24] sm:$0xf]
      %v272 = vld [vmem:[%s243 + $0x28] sm:$0xf]
      %v273 = vld [vmem:[%s243 + $0x2c] sm:$0xf]
      %v274 = vld [vmem:[%s243 + $0x30] sm:$0xf]
      %v275 = vld [vmem:[%s243 + $0x34] sm:$0xf]
      %v276 = vld [vmem:[%s243 + $0x38] sm:$0xf]
      %v277 = vld [vmem:[%s243 + $0x3c] sm:$0xf]
      %v278 = vld [vmem:[%s243 + $0x40] sm:$0xf]
      %v279 = vld [vmem:[%s243 + $0x44] sm:$0xf]
      %v280 = vld [vmem:[%s243 + $0x48] sm:$0xf]
      %v281 = vld [vmem:[%s243 + $0x4c] sm:$0xf]
      %v282 = vld [vmem:[%s243 + $0x50] sm:$0xf]
      %v283 = vld [vmem:[%s243 + $0x54] sm:$0xf]
      %v284 = vld [vmem:[%s243 + $0x58] sm:$0xf]
      %v285 = vld [vmem:[%s243 + $0x5c] sm:$0xf]
      %v286 = vld [vmem:[%s243 + $0x60] sm:$0xf]
      %v287 = vld [vmem:[%s243 + $0x64] sm:$0xf]
      %v288 = vld [vmem:[%s243 + $0x68] sm:$0xf]
      %v289 = vld [vmem:[%s243 + $0x6c] sm:$0xf]
      %v290 = vld [vmem:[%s243 + $0x70] sm:$0xf]
      %v291 = vld [vmem:[%s243 + $0x74] sm:$0xf]
      %v292 = vld [vmem:[%s243 + $0x78] sm:$0xf]
      %v293 = vld [vmem:[%s243 + $0x7c] sm:$0xf]
      %v294 = vld [vmem:[%s2] sm:$0xf]
      %v295 = vld [vmem:[%s2 + $0x4] sm:$0xf]
      %v296 = vld [vmem:[%s2 + $0x8] sm:$0xf]
      %v297 = vld [vmem:[%s2 + $0xc] sm:$0xf]
      %v298 = vld [vmem:[%s2 + $0x10] sm:$0x3]
      %v299 = vld [vmem:[%s249] sm:$0xf]
      %v300 = vld [vmem:[%s249 + $0x4] sm:$0xf]
      %v301 = vld [vmem:[%s249 + $0x8] sm:$0xf]
      %v302 = vld [vmem:[%s249 + $0xc] sm:$0xf]
      %v303 = vld [vmem:[%s249 + $0x10] sm:$0xf]
      %v304 = vld [vmem:[%s249 + $0x14] sm:$0xf]
      %v305 = vld [vmem:[%s249 + $0x18] sm:$0xf]
      %v306 = vld [vmem:[%s249 + $0x1c] sm:$0xf]
      %v307 = vld [vmem:[%s249 + $0x20] sm:$0xf]
      %v308 = vld [vmem:[%s249 + $0x24] sm:$0xf]
      %v309 = vld [vmem:[%s249 + $0x28] sm:$0xf]
      %v310 = vld [vmem:[%s249 + $0x2c] sm:$0xf]
      %v311 = vld [vmem:[%s249 + $0x30] sm:$0xf]
      %v312 = vld [vmem:[%s249 + $0x34] sm:$0xf]
      %v313 = vld [vmem:[%s249 + $0x38] sm:$0xf]
      %v314 = vld [vmem:[%s249 + $0x3c] sm:$0xf]
      %v315 = vld [vmem:[%s249 + $0x40] sm:$0xf]
      %v316 = vld [vmem:[%s249 + $0x44] sm:$0xf]
      %v317 = vld [vmem:[%s249 + $0x48] sm:$0xf]
      %v318 = vld [vmem:[%s249 + $0x4c] sm:$0xf]
      %v319 = vld [vmem:[%s249 + $0x50] sm:$0xf]
      %v320 = vld [vmem:[%s249 + $0x54] sm:$0xf]
      %v321 = vld [vmem:[%s249 + $0x58] sm:$0xf]
      %v322 = vld [vmem:[%s249 + $0x5c] sm:$0xf]
      %v323 = vld [vmem:[%s249 + $0x60] sm:$0xf]
      %v324 = vld [vmem:[%s249 + $0x64] sm:$0xf]
      %v325 = vld [vmem:[%s249 + $0x68] sm:$0xf]
      %v326 = vld [vmem:[%s249 + $0x6c] sm:$0xf]
      %v327 = vld [vmem:[%s249 + $0x70] sm:$0xf]
      %v328 = vld [vmem:[%s249 + $0x74] sm:$0xf]
      %v329 = vld [vmem:[%s249 + $0x78] sm:$0xf]
      %v330 = vld [vmem:[%s249 + $0x7c] sm:$0xf]
      %v331 = vld [vmem:[%s3] sm:$0xf]
      %v332 = vld [vmem:[%s3 + $0x4] sm:$0xf]
      %v333 = vld [vmem:[%s3 + $0x8] sm:$0xf]
      %v334 = vld [vmem:[%s3 + $0xc] sm:$0xf]
      %v335 = vld [vmem:[%s3 + $0x10] sm:$0x3]
      %v368 = vunpack.c.l.b16 %v299
      %v369 = vunpack.c.l.b16 %v300
      %v370 = vunpack.c.l.b16 %v301
      %v371 = vunpack.c.l.b16 %v302
      %v372 = vunpack.c.l.b16 %v303
      %v373 = vunpack.c.l.b16 %v304
      %v374 = vunpack.c.l.b16 %v305
      %v375 = vunpack.c.l.b16 %v306
      %v376 = vunpack.c.l.b16 %v307
      %v377 = vunpack.c.l.b16 %v308
      %v378 = vunpack.c.l.b16 %v309
      %v379 = vunpack.c.l.b16 %v310
      %v380 = vunpack.c.l.b16 %v311
      %v381 = vunpack.c.l.b16 %v312
      %v382 = vunpack.c.l.b16 %v313
      %v383 = vunpack.c.l.b16 %v314
      %v384 = vunpack.c.l.b16 %v315
      %v385 = vunpack.c.l.b16 %v316
      %v386 = vunpack.c.l.b16 %v317
      %v387 = vunpack.c.l.b16 %v318
      %v388 = vunpack.c.l.b16 %v319
      %v389 = vunpack.c.l.b16 %v320
      %v390 = vunpack.c.l.b16 %v321
      %v391 = vunpack.c.l.b16 %v322
      %v392 = vunpack.c.l.b16 %v323
      %v393 = vunpack.c.l.b16 %v324
      %v394 = vunpack.c.l.b16 %v325
      %v395 = vunpack.c.l.b16 %v326
      %v396 = vunpack.c.l.b16 %v327
      %v397 = vunpack.c.l.b16 %v328
      %v398 = vunpack.c.l.b16 %v329
      %v399 = vunpack.c.l.b16 %v330
      %v400 = vpack.c.b16 %v369, %v368
      %v401 = vpack.c.b16 %v371, %v370
      %v402 = vpack.c.b16 %v373, %v372
      %v403 = vpack.c.b16 %v375, %v374
      %v404 = vpack.c.b16 %v377, %v376
      %v405 = vpack.c.b16 %v379, %v378
      %v406 = vpack.c.b16 %v381, %v380
      %v407 = vpack.c.b16 %v383, %v382
      %v408 = vpack.c.b16 %v385, %v384
      %v409 = vpack.c.b16 %v387, %v386
      %v410 = vpack.c.b16 %v389, %v388
      %v411 = vpack.c.b16 %v391, %v390
      %v412 = vpack.c.b16 %v393, %v392
      %v413 = vpack.c.b16 %v395, %v394
      %v414 = vpack.c.b16 %v397, %v396
      %v415 = vpack.c.b16 %v399, %v398
      %v421 = vunpack.c.l.b16 %v331
      %v422 = vunpack.c.l.b16 %v332
      %v423 = vunpack.c.l.b16 %v333
      %v424 = vunpack.c.l.b16 %v334
      %v425 = vunpack.c.l.b16 %v335
      %v426 = vpack.c.b16 %v422, %v421
      %v427 = vpack.c.b16 %v424, %v423
      %v428 = vpack.c.b16 %v425, %v425
      %vm431 = vcmask 293888
      %v433 = vsel %vm431, %v400, 0
      %v436 = vsel %vm431, %v401, 0
      %v439 = vsel %vm431, %v402, 0
      %v442 = vsel %vm431, %v403, 0
      %v445 = vsel %vm431, %v404, 0
      %v448 = vsel %vm431, %v405, 0
      %v451 = vsel %vm431, %v406, 0
      %v454 = vsel %vm431, %v407, 0
      %v457 = vsel %vm431, %v408, 0
      %v460 = vsel %vm431, %v409, 0
      %v463 = vsel %vm431, %v410, 0
      %v466 = vsel %vm431, %v411, 0
      %v469 = vsel %vm431, %v412, 0
      %v472 = vsel %vm431, %v413, 0
      %v475 = vsel %vm431, %v414, 0
      %v478 = vsel %vm431, %v415, 0
      %vm480 = vcmask 1041408
      %v482 = vsel %vm480, %v428, 0
      %484 = vmatprep.subr.bf16.mxu0 0
      %485 = vmatpush1.bf16.msra.mxu0 %v426
      %486 = vmatprep.subr.bf16.mxu0 0
      %487 = vmatpush1.bf16.msra.mxu0 %v427
      %488 = vmatprep.subr.bf16.mxu0 0
      %489 = vmatpush1.bf16.msra.mxu0 %v482
      %490 = vmatprep.subr.bf16.mxu0 0
      %491 = vmatpush1.bf16.msra.mxu0 0
      %492 = vmatprep.subr.bf16.mxu0 0
      %493 = vmatpush1.bf16.msra.mxu0 0
      %494 = vmatprep.subr.bf16.mxu0 0
      %495 = vmatpush1.bf16.msra.mxu0 0
      %496 = vmatprep.subr.bf16.mxu0 0
      %497 = vmatpush1.bf16.msra.mxu0 0
      %498 = vmatprep.subr.bf16.mxu0 0
      %499 = vmatpush1.bf16.msra.mxu0 0
      %500 = vmatprep.subr.bf16.mxu0 0
      %501 = vmatpush1.bf16.msra.mxu0 0
      %502 = vmatprep.subr.bf16.mxu0 0
      %503 = vmatpush1.bf16.msra.mxu0 0
      %504 = vmatprep.subr.bf16.mxu0 0
      %505 = vmatpush1.bf16.msra.mxu0 0
      %506 = vmatprep.subr.bf16.mxu0 0
      %507 = vmatpush1.bf16.msra.mxu0 0
      %508 = vmatprep.subr.bf16.mxu0 0
      %509 = vmatpush1.bf16.msra.mxu0 0
      %510 = vmatprep.subr.bf16.mxu0 0
      %511 = vmatpush1.bf16.msra.mxu0 0
      %512 = vmatprep.subr.bf16.mxu0 0
      %513 = vmatpush1.bf16.msra.mxu0 0
      %514 = vmatprep.subr.bf16.mxu0 0
      %515 = vmatpush1.bf16.msra.mxu0 0
      %516 = vmatprep.mubr.bf16.mxu0 0
      %517 = vmatmul.mubr.bf16.gmra.mrb[0].mxu0 %v433
      %v518 = vpop.f32.mrb[0].mxu0
      %v519 = vadd.f32 0.0, %v518
      %v520 = vpop.f32.mrb[0].mxu0
      %v521 = vpop.f32.mrb[0].mxu0
      %v522 = vadd.f32 0.0, %v521
      %v523 = vpop.f32.mrb[0].mxu0
      %524 = vmatprep.mubr.bf16.mxu0 0
      %525 = vmatmul.mubr.bf16.gmra.mrb[0].mxu0 %v436
      %v526 = vpop.f32.mrb[0].mxu0
      %v527 = vadd.f32 0.0, %v526
      %v528 = vpop.f32.mrb[0].mxu0
      %v529 = vpop.f32.mrb[0].mxu0
      %v530 = vadd.f32 0.0, %v529
      %v531 = vpop.f32.mrb[0].mxu0
      %532 = vmatprep.mubr.bf16.mxu0 0
      %533 = vmatmul.mubr.bf16.gmra.mrb[0].mxu0 %v439
      %v534 = vpop.f32.mrb[0].mxu0
      %v535 = vadd.f32 0.0, %v534
      %v536 = vpop.f32.mrb[0].mxu0
      %v537 = vpop.f32.mrb[0].mxu0
      %v538 = vadd.f32 0.0, %v537
      %v539 = vpop.f32.mrb[0].mxu0
      %540 = vmatprep.mubr.bf16.mxu0 0
      %541 = vmatmul.mubr.bf16.gmra.mrb[0].mxu0 %v442
      %v542 = vpop.f32.mrb[0].mxu0
      %v543 = vadd.f32 0.0, %v542
      %v544 = vpop.f32.mrb[0].mxu0
      %v545 = vpop.f32.mrb[0].mxu0
      %v546 = vadd.f32 0.0, %v545
      %v547 = vpop.f32.mrb[0].mxu0
      %548 = vmatprep.mubr.bf16.mxu0 0
      %549 = vmatmul.mubr.bf16.gmra.mrb[0].mxu0 %v445
      %v550 = vpop.f32.mrb[0].mxu0
      %v551 = vadd.f32 0.0, %v550
      %v552 = vpop.f32.mrb[0].mxu0
      %v553 = vpop.f32.mrb[0].mxu0
      %v554 = vadd.f32 0.0, %v553
      %v555 = vpop.f32.mrb[0].mxu0
      %556 = vmatprep.mubr.bf16.mxu0 0
      %557 = vmatmul.mubr.bf16.gmra.mrb[0].mxu0 %v448
      %v558 = vpop.f32.mrb[0].mxu0
      %v559 = vadd.f32 0.0, %v558
      %v560 = vpop.f32.mrb[0].mxu0
      %v561 = vpop.f32.mrb[0].mxu0
      %v562 = vadd.f32 0.0, %v561
      %v563 = vpop.f32.mrb[0].mxu0
      %564 = vmatprep.mubr.bf16.mxu0 0
      %565 = vmatmul.mubr.bf16.gmra.mrb[0].mxu0 %v451
      %v566 = vpop.f32.mrb[0].mxu0
      %v567 = vadd.f32 0.0, %v566
      %v568 = vpop.f32.mrb[0].mxu0
      %v569 = vpop.f32.mrb[0].mxu0
      %v570 = vadd.f32 0.0, %v569
      %v571 = vpop.f32.mrb[0].mxu0
      %572 = vmatprep.mubr.bf16.mxu0 0
      %573 = vmatmul.mubr.bf16.gmra.mrb[0].mxu0 %v454
      %v574 = vpop.f32.mrb[0].mxu0
      %v575 = vadd.f32 0.0, %v574
      %v576 = vpop.f32.mrb[0].mxu0
      %v577 = vpop.f32.mrb[0].mxu0
      %v578 = vadd.f32 0.0, %v577
      %v579 = vpop.f32.mrb[0].mxu0
      %580 = vmatprep.mubr.bf16.mxu0 0
      %581 = vmatmul.mubr.bf16.gmra.mrb[0].mxu0 %v457
      %v582 = vpop.f32.mrb[0].mxu0
      %v583 = vadd.f32 0.0, %v582
      %v584 = vpop.f32.mrb[0].mxu0
      %v585 = vpop.f32.mrb[0].mxu0
      %v586 = vadd.f32 0.0, %v585
      %v587 = vpop.f32.mrb[0].mxu0
      %588 = vmatprep.mubr.bf16.mxu0 0
      %589 = vmatmul.mubr.bf16.gmra.mrb[0].mxu0 %v460
      %v590 = vpop.f32.mrb[0].mxu0
      %v591 = vadd.f32 0.0, %v590
      %v592 = vpop.f32.mrb[0].mxu0
      %v593 = vpop.f32.mrb[0].mxu0
      %v594 = vadd.f32 0.0, %v593
      %v595 = vpop.f32.mrb[0].mxu0
      %596 = vmatprep.mubr.bf16.mxu0 0
      %597 = vmatmul.mubr.bf16.gmra.mrb[0].mxu0 %v463
      %v598 = vpop.f32.mrb[0].mxu0
      %v599 = vadd.f32 0.0, %v598
      %v600 = vpop.f32.mrb[0].mxu0
      %v601 = vpop.f32.mrb[0].mxu0
      %v602 = vadd.f32 0.0, %v601
      %v603 = vpop.f32.mrb[0].mxu0
      %604 = vmatprep.mubr.bf16.mxu0 0
      %605 = vmatmul.mubr.bf16.gmra.mrb[0].mxu0 %v466
      %v606 = vpop.f32.mrb[0].mxu0
      %v607 = vadd.f32 0.0, %v606
      %v608 = vpop.f32.mrb[0].mxu0
      %v609 = vpop.f32.mrb[0].mxu0
      %v610 = vadd.f32 0.0, %v609
      %v611 = vpop.f32.mrb[0].mxu0
      %612 = vmatprep.mubr.bf16.mxu0 0
      %613 = vmatmul.mubr.bf16.gmra.mrb[0].mxu0 %v469
      %v614 = vpop.f32.mrb[0].mxu0
      %v615 = vadd.f32 0.0, %v614
      %v616 = vpop.f32.mrb[0].mxu0
      %v617 = vpop.f32.mrb[0].mxu0
      %v618 = vadd.f32 0.0, %v617
      %v619 = vpop.f32.mrb[0].mxu0
      %620 = vmatprep.mubr.bf16.mxu0 0
      %621 = vmatmul.mubr.bf16.gmra.mrb[0].mxu0 %v472
      %v622 = vpop.f32.mrb[0].mxu0
      %v623 = vadd.f32 0.0, %v622
      %v624 = vpop.f32.mrb[0].mxu0
      %v625 = vpop.f32.mrb[0].mxu0
      %v626 = vadd.f32 0.0, %v625
      %v627 = vpop.f32.mrb[0].mxu0
      %628 = vmatprep.mubr.bf16.mxu0 0
      %629 = vmatmul.mubr.bf16.gmra.mrb[0].mxu0 %v475
      %v630 = vpop.f32.mrb[0].mxu0
      %v631 = vadd.f32 0.0, %v630
      %v632 = vpop.f32.mrb[0].mxu0
      %v633 = vpop.f32.mrb[0].mxu0
      %v634 = vadd.f32 0.0, %v633
      %v635 = vpop.f32.mrb[0].mxu0
      %636 = vmatprep.mubr.bf16.mxu0 0
      %637 = vmatmul.mubr.bf16.gmra.mrb[0].mxu0 %v478
      %v638 = vpop.f32.mrb[0].mxu0
      %v639 = vadd.f32 0.0, %v638
      %v640 = vpop.f32.mrb[0].mxu0
      %v641 = vpop.f32.mrb[0].mxu0
      %v642 = vadd.f32 0.0, %v641
      %v643 = vpop.f32.mrb[0].mxu0
      %644 = vdwg.mxu0
      %v677 = vunpack.c.l.b16 %v262
      %v678 = vunpack.c.l.b16 %v263
      %v679 = vunpack.c.l.b16 %v264
      %v680 = vunpack.c.l.b16 %v265
      %v681 = vunpack.c.l.b16 %v266
      %v682 = vunpack.c.l.b16 %v267
      %v683 = vunpack.c.l.b16 %v268
      %v684 = vunpack.c.l.b16 %v269
      %v685 = vunpack.c.l.b16 %v270
      %v686 = vunpack.c.l.b16 %v271
      %v687 = vunpack.c.l.b16 %v272
      %v688 = vunpack.c.l.b16 %v273
      %v689 = vunpack.c.l.b16 %v274
      %v690 = vunpack.c.l.b16 %v275
      %v691 = vunpack.c.l.b16 %v276
      %v692 = vunpack.c.l.b16 %v277
      %v693 = vunpack.c.l.b16 %v278
      %v694 = vunpack.c.l.b16 %v279
      %v695 = vunpack.c.l.b16 %v280
      %v696 = vunpack.c.l.b16 %v281
      %v697 = vunpack.c.l.b16 %v282
      %v698 = vunpack.c.l.b16 %v283
      %v699 = vunpack.c.l.b16 %v284
      %v700 = vunpack.c.l.b16 %v285
      %v701 = vunpack.c.l.b16 %v286
      %v702 = vunpack.c.l.b16 %v287
      %v703 = vunpack.c.l.b16 %v288
      %v704 = vunpack.c.l.b16 %v289
      %v705 = vunpack.c.l.b16 %v290
      %v706 = vunpack.c.l.b16 %v291
      %v707 = vunpack.c.l.b16 %v292
      %v708 = vunpack.c.l.b16 %v293
      %v709 = vpack.c.b16 %v678, %v677
      %v710 = vpack.c.b16 %v680, %v679
      %v711 = vpack.c.b16 %v682, %v681
      %v712 = vpack.c.b16 %v684, %v683
      %v713 = vpack.c.b16 %v686, %v685
      %v714 = vpack.c.b16 %v688, %v687
      %v715 = vpack.c.b16 %v690, %v689
      %v716 = vpack.c.b16 %v692, %v691
      %v717 = vpack.c.b16 %v694, %v693
      %v718 = vpack.c.b16 %v696, %v695
      %v719 = vpack.c.b16 %v698, %v697
      %v720 = vpack.c.b16 %v700, %v699
      %v721 = vpack.c.b16 %v702, %v701
      %v722 = vpack.c.b16 %v704, %v703
      %v723 = vpack.c.b16 %v706, %v705
      %v724 = vpack.c.b16 %v708, %v707
      %v730 = vunpack.c.l.b16 %v294
      %v731 = vunpack.c.l.b16 %v295
      %v732 = vunpack.c.l.b16 %v296
      %v733 = vunpack.c.l.b16 %v297
      %v734 = vunpack.c.l.b16 %v298
      %v735 = vpack.c.b16 %v731, %v730
      %v736 = vpack.c.b16 %v733, %v732
      %v737 = vpack.c.b16 %v734, %v734
      %v741 = vsel %vm431, %v709, 0
      %v744 = vsel %vm431, %v710, 0
      %v747 = vsel %vm431, %v711, 0
      %v750 = vsel %vm431, %v712, 0
      %v753 = vsel %vm431, %v713, 0
      %v756 = vsel %vm431, %v714, 0
      %v759 = vsel %vm431, %v715, 0
      %v762 = vsel %vm431, %v716, 0
      %v765 = vsel %vm431, %v717, 0
      %v768 = vsel %vm431, %v718, 0
      %v771 = vsel %vm431, %v719, 0
      %v774 = vsel %vm431, %v720, 0
      %v777 = vsel %vm431, %v721, 0
      %v780 = vsel %vm431, %v722, 0
      %v783 = vsel %vm431, %v723, 0
      %v786 = vsel %vm431, %v724, 0
      %v789 = vsel %vm480, %v737, 0
      %791 = vmatprep.subr.bf16.mxu0 0
      %792 = vmatpush1.bf16.msra.mxu0 %v735
      %793 = vmatprep.subr.bf16.mxu0 0
      %794 = vmatpush1.bf16.msra.mxu0 %v736
      %795 = vmatprep.subr.bf16.mxu0 0
      %796 = vmatpush1.bf16.msra.mxu0 %v789
      %797 = vmatprep.subr.bf16.mxu0 0
      %798 = vmatpush1.bf16.msra.mxu0 0
      %799 = vmatprep.subr.bf16.mxu0 0
      %800 = vmatpush1.bf16.msra.mxu0 0
      %801 = vmatprep.subr.bf16.mxu0 0
      %802 = vmatpush1.bf16.msra.mxu0 0
      %803 = vmatprep.subr.bf16.mxu0 0
      %804 = vmatpush1.bf16.msra.mxu0 0
      %805 = vmatprep.subr.bf16.mxu0 0
      %806 = vmatpush1.bf16.msra.mxu0 0
      %807 = vmatprep.subr.bf16.mxu0 0
      %808 = vmatpush1.bf16.msra.mxu0 0
      %809 = vmatprep.subr.bf16.mxu0 0
      %810 = vmatpush1.bf16.msra.mxu0 0
      %811 = vmatprep.subr.bf16.mxu0 0
      %812 = vmatpush1.bf16.msra.mxu0 0
      %813 = vmatprep.subr.bf16.mxu0 0
      %814 = vmatpush1.bf16.msra.mxu0 0
      %815 = vmatprep.subr.bf16.mxu0 0
      %816 = vmatpush1.bf16.msra.mxu0 0
      %817 = vmatprep.subr.bf16.mxu0 0
      %818 = vmatpush1.bf16.msra.mxu0 0
      %819 = vmatprep.subr.bf16.mxu0 0
      %820 = vmatpush1.bf16.msra.mxu0 0
      %821 = vmatprep.subr.bf16.mxu0 0
      %822 = vmatpush1.bf16.msra.mxu0 0
      %823 = vmatprep.mubr.bf16.mxu0 0
      %824 = vmatmul.mubr.bf16.gmra.mrb[0].mxu0 %v741
      %v825 = vpop.f32.mrb[0].mxu0
      %v826 = vadd.f32 %v519, %v825
      %v827 = vpop.f32.mrb[0].mxu0
      %v828 = vpop.f32.mrb[0].mxu0
      %v829 = vadd.f32 %v522, %v828
      %v830 = vpop.f32.mrb[0].mxu0
      %831 = vmatprep.mubr.bf16.mxu0 0
      %832 = vmatmul.mubr.bf16.gmra.mrb[0].mxu0 %v744
      %v833 = vpop.f32.mrb[0].mxu0
      %v834 = vadd.f32 %v527, %v833
      %v835 = vpop.f32.mrb[0].mxu0
      %v836 = vpop.f32.mrb[0].mxu0
      %v837 = vadd.f32 %v530, %v836
      %v838 = vpop.f32.mrb[0].mxu0
      %839 = vmatprep.mubr.bf16.mxu0 0
      %840 = vmatmul.mubr.bf16.gmra.mrb[0].mxu0 %v747
      %v841 = vpop.f32.mrb[0].mxu0
      %v842 = vadd.f32 %v535, %v841
      %v843 = vpop.f32.mrb[0].mxu0
      %v844 = vpop.f32.mrb[0].mxu0
      %v845 = vadd.f32 %v538, %v844
      %v846 = vpop.f32.mrb[0].mxu0
      %847 = vmatprep.mubr.bf16.mxu0 0
      %848 = vmatmul.mubr.bf16.gmra.mrb[0].mxu0 %v750
      %v849 = vpop.f32.mrb[0].mxu0
      %v850 = vadd.f32 %v543, %v849
      %v851 = vpop.f32.mrb[0].mxu0
      %v852 = vpop.f32.mrb[0].mxu0
      %v853 = vadd.f32 %v546, %v852
      %v854 = vpop.f32.mrb[0].mxu0
      %855 = vmatprep.mubr.bf16.mxu0 0
      %856 = vmatmul.mubr.bf16.gmra.mrb[0].mxu0 %v753
      %v857 = vpop.f32.mrb[0].mxu0
      %v858 = vadd.f32 %v551, %v857
      %v859 = vpop.f32.mrb[0].mxu0
      %v860 = vpop.f32.mrb[0].mxu0
      %v861 = vadd.f32 %v554, %v860
      %v862 = vpop.f32.mrb[0].mxu0
      %863 = vmatprep.mubr.bf16.mxu0 0
      %864 = vmatmul.mubr.bf16.gmra.mrb[0].mxu0 %v756
      %v865 = vpop.f32.mrb[0].mxu0
      %v866 = vadd.f32 %v559, %v865
      %v867 = vpop.f32.mrb[0].mxu0
      %v868 = vpop.f32.mrb[0].mxu0
      %v869 = vadd.f32 %v562, %v868
      %v870 = vpop.f32.mrb[0].mxu0
      %871 = vmatprep.mubr.bf16.mxu0 0
      %872 = vmatmul.mubr.bf16.gmra.mrb[0].mxu0 %v759
      %v873 = vpop.f32.mrb[0].mxu0
      %v874 = vadd.f32 %v567, %v873
      %v875 = vpop.f32.mrb[0].mxu0
      %v876 = vpop.f32.mrb[0].mxu0
      %v877 = vadd.f32 %v570, %v876
      %v878 = vpop.f32.mrb[0].mxu0
      %879 = vmatprep.mubr.bf16.mxu0 0
      %880 = vmatmul.mubr.bf16.gmra.mrb[0].mxu0 %v762
      %v881 = vpop.f32.mrb[0].mxu0
      %v882 = vadd.f32 %v575, %v881
      %v883 = vpop.f32.mrb[0].mxu0
      %v884 = vpop.f32.mrb[0].mxu0
      %v885 = vadd.f32 %v578, %v884
      %v886 = vpop.f32.mrb[0].mxu0
      %887 = vmatprep.mubr.bf16.mxu0 0
      %888 = vmatmul.mubr.bf16.gmra.mrb[0].mxu0 %v765
      %v889 = vpop.f32.mrb[0].mxu0
      %v890 = vadd.f32 %v583, %v889
      %v891 = vpop.f32.mrb[0].mxu0
      %v892 = vpop.f32.mrb[0].mxu0
      %v893 = vadd.f32 %v586, %v892
      %v894 = vpop.f32.mrb[0].mxu0
      %895 = vmatprep.mubr.bf16.mxu0 0
      %896 = vmatmul.mubr.bf16.gmra.mrb[0].mxu0 %v768
      %v897 = vpop.f32.mrb[0].mxu0
      %v898 = vadd.f32 %v591, %v897
      %v899 = vpop.f32.mrb[0].mxu0
      %v900 = vpop.f32.mrb[0].mxu0
      %v901 = vadd.f32 %v594, %v900
      %v902 = vpop.f32.mrb[0].mxu0
      %903 = vmatprep.mubr.bf16.mxu0 0
      %904 = vmatmul.mubr.bf16.gmra.mrb[0].mxu0 %v771
      %v905 = vpop.f32.mrb[0].mxu0
      %v906 = vadd.f32 %v599, %v905
      %v907 = vpop.f32.mrb[0].mxu0
      %v908 = vpop.f32.mrb[0].mxu0
      %v909 = vadd.f32 %v602, %v908
      %v910 = vpop.f32.mrb[0].mxu0
      %911 = vmatprep.mubr.bf16.mxu0 0
      %912 = vmatmul.mubr.bf16.gmra.mrb[0].mxu0 %v774
      %v913 = vpop.f32.mrb[0].mxu0
      %v914 = vadd.f32 %v607, %v913
      %v915 = vpop.f32.mrb[0].mxu0
      %v916 = vpop.f32.mrb[0].mxu0
      %v917 = vadd.f32 %v610, %v916
      %v918 = vpop.f32.mrb[0].mxu0
      %919 = vmatprep.mubr.bf16.mxu0 0
      %920 = vmatmul.mubr.bf16.gmra.mrb[0].mxu0 %v777
      %v921 = vpop.f32.mrb[0].mxu0
      %v922 = vadd.f32 %v615, %v921
      %v923 = vpop.f32.mrb[0].mxu0
      %v924 = vpop.f32.mrb[0].mxu0
      %v925 = vadd.f32 %v618, %v924
      %v926 = vpop.f32.mrb[0].mxu0
      %927 = vmatprep.mubr.bf16.mxu0 0
      %928 = vmatmul.mubr.bf16.gmra.mrb[0].mxu0 %v780
      %v929 = vpop.f32.mrb[0].mxu0
      %v930 = vadd.f32 %v623, %v929
      %v931 = vpop.f32.mrb[0].mxu0
      %v932 = vpop.f32.mrb[0].mxu0
      %v933 = vadd.f32 %v626, %v932
      %v934 = vpop.f32.mrb[0].mxu0
      %935 = vmatprep.mubr.bf16.mxu0 0
      %936 = vmatmul.mubr.bf16.gmra.mrb[0].mxu0 %v783
      %v937 = vpop.f32.mrb[0].mxu0
      %v938 = vadd.f32 %v631, %v937
      %v939 = vpop.f32.mrb[0].mxu0
      %v940 = vpop.f32.mrb[0].mxu0
      %v941 = vadd.f32 %v634, %v940
      %v942 = vpop.f32.mrb[0].mxu0
      %943 = vmatprep.mubr.bf16.mxu0 0
      %944 = vmatmul.mubr.bf16.gmra.mrb[0].mxu0 %v786
      %v945 = vpop.f32.mrb[0].mxu0
      %v946 = vadd.f32 %v639, %v945
      %v947 = vpop.f32.mrb[0].mxu0
      %v948 = vpop.f32.mrb[0].mxu0
      %v949 = vadd.f32 %v642, %v948
      %v950 = vpop.f32.mrb[0].mxu0
      %951 = vdwg.mxu0
      %v952 = vpack.c.bf16 %v829, %v826
      %v953 = vpack.c.bf16 %v837, %v834
      %v954 = vpack.c.bf16 %v845, %v842
      %v955 = vpack.c.bf16 %v853, %v850
      %v956 = vpack.c.bf16 %v861, %v858
      %v957 = vpack.c.bf16 %v869, %v866
      %v958 = vpack.c.bf16 %v877, %v874
      %v959 = vpack.c.bf16 %v885, %v882
      %v960 = vpack.c.bf16 %v893, %v890
      %v961 = vpack.c.bf16 %v901, %v898
      %v962 = vpack.c.bf16 %v909, %v906
      %v963 = vpack.c.bf16 %v917, %v914
      %v964 = vpack.c.bf16 %v925, %v922
      %v965 = vpack.c.bf16 %v933, %v930
      %v966 = vpack.c.bf16 %v941, %v938
      %v967 = vpack.c.bf16 %v949, %v946
      %v984 = vunpack.c.l.b16 %v952
      %v985 = vunpack.c.h.b16 %v952
      %v986 = vunpack.c.l.b16 %v953
      %v987 = vunpack.c.h.b16 %v953
      %v988 = vunpack.c.l.b16 %v954
      %v989 = vunpack.c.h.b16 %v954
      %v990 = vunpack.c.l.b16 %v955
      %v991 = vunpack.c.h.b16 %v955
      %v992 = vunpack.c.l.b16 %v956
      %v993 = vunpack.c.h.b16 %v956
      %v994 = vunpack.c.l.b16 %v957
      %v995 = vunpack.c.h.b16 %v957
      %v996 = vunpack.c.l.b16 %v958
      %v997 = vunpack.c.h.b16 %v958
      %v998 = vunpack.c.l.b16 %v959
      %v999 = vunpack.c.h.b16 %v959
      %v1000 = vunpack.c.l.b16 %v960
      %v1001 = vunpack.c.h.b16 %v960
      %v1002 = vunpack.c.l.b16 %v961
      %v1003 = vunpack.c.h.b16 %v961
      %v1004 = vunpack.c.l.b16 %v962
      %v1005 = vunpack.c.h.b16 %v962
      %v1006 = vunpack.c.l.b16 %v963
      %v1007 = vunpack.c.h.b16 %v963
      %v1008 = vunpack.c.l.b16 %v964
      %v1009 = vunpack.c.h.b16 %v964
      %v1010 = vunpack.c.l.b16 %v965
      %v1011 = vunpack.c.h.b16 %v965
      %v1012 = vunpack.c.l.b16 %v966
      %v1013 = vunpack.c.h.b16 %v966
      %v1014 = vunpack.c.l.b16 %v967
      %v1015 = vunpack.c.h.b16 %v967
      %v1016 = vpack.c.b16 %v984, %v984
      %v1017 = vpack.c.b16 %v985, %v985
      %v1018 = vpack.c.b16 %v986, %v986
      %v1019 = vpack.c.b16 %v987, %v987
      %v1020 = vpack.c.b16 %v988, %v988
      %v1021 = vpack.c.b16 %v989, %v989
      %v1022 = vpack.c.b16 %v990, %v990
      %v1023 = vpack.c.b16 %v991, %v991
      %v1024 = vpack.c.b16 %v992, %v992
      %v1025 = vpack.c.b16 %v993, %v993
      %v1026 = vpack.c.b16 %v994, %v994
      %v1027 = vpack.c.b16 %v995, %v995
      %v1028 = vpack.c.b16 %v996, %v996
      %v1029 = vpack.c.b16 %v997, %v997
      %v1030 = vpack.c.b16 %v998, %v998
      %v1031 = vpack.c.b16 %v999, %v999
      %v1032 = vpack.c.b16 %v1000, %v1000
      %v1033 = vpack.c.b16 %v1001, %v1001
      %v1034 = vpack.c.b16 %v1002, %v1002
      %v1035 = vpack.c.b16 %v1003, %v1003
      %v1036 = vpack.c.b16 %v1004, %v1004
      %v1037 = vpack.c.b16 %v1005, %v1005
      %v1038 = vpack.c.b16 %v1006, %v1006
      %v1039 = vpack.c.b16 %v1007, %v1007
      %v1040 = vpack.c.b16 %v1008, %v1008
      %v1041 = vpack.c.b16 %v1009, %v1009
      %v1042 = vpack.c.b16 %v1010, %v1010
      %v1043 = vpack.c.b16 %v1011, %v1011
      %v1044 = vpack.c.b16 %v1012, %v1012
      %v1045 = vpack.c.b16 %v1013, %v1013
      %v1046 = vpack.c.b16 %v1014, %v1014
      %v1047 = vpack.c.b16 %v1015, %v1015
      %1080 = vst [vmem:[%s255] sm:$0xf] %v1016
      %1081 = vst [vmem:[%s255 + $0x4] sm:$0xf] %v1017
      %1082 = vst [vmem:[%s255 + $0x8] sm:$0xf] %v1018
      %1083 = vst [vmem:[%s255 + $0xc] sm:$0xf] %v1019
      %1084 = vst [vmem:[%s255 + $0x10] sm:$0xf] %v1020
      %1085 = vst [vmem:[%s255 + $0x14] sm:$0xf] %v1021
      %1086 = vst [vmem:[%s255 + $0x18] sm:$0xf] %v1022
      %1087 = vst [vmem:[%s255 + $0x1c] sm:$0xf] %v1023
      %1088 = vst [vmem:[%s255 + $0x20] sm:$0xf] %v1024
      %1089 = vst [vmem:[%s255 + $0x24] sm:$0xf] %v1025
      %1090 = vst [vmem:[%s255 + $0x28] sm:$0xf] %v1026
      %1091 = vst [vmem:[%s255 + $0x2c] sm:$0xf] %v1027
      %1092 = vst [vmem:[%s255 + $0x30] sm:$0xf] %v1028
      %1093 = vst [vmem:[%s255 + $0x34] sm:$0xf] %v1029
      %1094 = vst [vmem:[%s255 + $0x38] sm:$0xf] %v1030
      %1095 = vst [vmem:[%s255 + $0x3c] sm:$0xf] %v1031
      %1096 = vst [vmem:[%s255 + $0x40] sm:$0xf] %v1032
      %1097 = vst [vmem:[%s255 + $0x44] sm:$0xf] %v1033
      %1098 = vst [vmem:[%s255 + $0x48] sm:$0xf] %v1034
      %1099 = vst [vmem:[%s255 + $0x4c] sm:$0xf] %v1035
      %1100 = vst [vmem:[%s255 + $0x50] sm:$0xf] %v1036
      %1101 = vst [vmem:[%s255 + $0x54] sm:$0xf] %v1037
      %1102 = vst [vmem:[%s255 + $0x58] sm:$0xf] %v1038
      %1103 = vst [vmem:[%s255 + $0x5c] sm:$0xf] %v1039
      %1104 = vst [vmem:[%s255 + $0x60] sm:$0xf] %v1040
      %1105 = vst [vmem:[%s255 + $0x64] sm:$0xf] %v1041
      %1106 = vst [vmem:[%s255 + $0x68] sm:$0xf] %v1042
      %1107 = vst [vmem:[%s255 + $0x6c] sm:$0xf] %v1043
      %1108 = vst [vmem:[%s255 + $0x70] sm:$0xf] %v1044
      %1109 = vst [vmem:[%s255 + $0x74] sm:$0xf] %v1045
      %1110 = vst [vmem:[%s255 + $0x78] sm:$0xf] %v1046
      %1111 = vst [vmem:[%s255 + $0x7c] sm:$0xf] %v1047
      %v1112 = vadd.f32 %v826, %v829
      %v1113 = vadd.f32 %v1112, %v834
      %v1114 = vadd.f32 %v1113, %v837
      %v1115 = vadd.f32 %v1114, %v842
      %v1116 = vadd.f32 %v1115, %v845
      %v1117 = vadd.f32 %v1116, %v850
      %v1118 = vadd.f32 %v1117, %v853
      %v1119 = vadd.f32 %v1118, %v858
      %v1120 = vadd.f32 %v1119, %v861
      %v1121 = vadd.f32 %v1120, %v866
      %v1122 = vadd.f32 %v1121, %v869
      %v1123 = vadd.f32 %v1122, %v874
      %v1124 = vadd.f32 %v1123, %v877
      %v1125 = vadd.f32 %v1124, %v882
      %v1126 = vadd.f32 %v1125, %v885
      %v1127 = vadd.f32 %v1126, %v890
      %v1128 = vadd.f32 %v1127, %v893
      %v1129 = vadd.f32 %v1128, %v898
      %v1130 = vadd.f32 %v1129, %v901
      %v1131 = vadd.f32 %v1130, %v906
      %v1132 = vadd.f32 %v1131, %v909
      %v1133 = vadd.f32 %v1132, %v914
      %v1134 = vadd.f32 %v1133, %v917
      %v1135 = vadd.f32 %v1134, %v922
      %v1136 = vadd.f32 %v1135, %v925
      %v1137 = vadd.f32 %v1136, %v930
      %v1138 = vadd.f32 %v1137, %v933
      %v1139 = vadd.f32 %v1138, %v938
      %v1140 = vadd.f32 %v1139, %v941
      %v1141 = vadd.f32 %v1140, %v946
      %v1142 = vadd.f32 %v1141, %v949
      %v1143 = vrot.slane %v1142, 4
      %v1144 = vadd.f32 %v1142, %v1143
      %v1145 = vrot.slane %v1144, 2
      %v1146 = vadd.f32 %v1144, %v1145
      %v1147 = vrot.slane %v1146, 1
      %v1148 = vadd.f32 %v1146, %v1147
      %1149 = vst [vmem:[%s260] sm:$0x1] %v1148
      %v1150 = vmul.f32 %v826, %v826
      %v1151 = vmul.f32 %v829, %v829
      %v1152 = vmul.f32 %v834, %v834
      %v1153 = vmul.f32 %v837, %v837
      %v1154 = vmul.f32 %v842, %v842
      %v1155 = vmul.f32 %v845, %v845
      %v1156 = vmul.f32 %v850, %v850
      %v1157 = vmul.f32 %v853, %v853
      %v1158 = vmul.f32 %v858, %v858
      %v1159 = vmul.f32 %v861, %v861
      %v1160 = vmul.f32 %v866, %v866
      %v1161 = vmul.f32 %v869, %v869
      %v1162 = vmul.f32 %v874, %v874
      %v1163 = vmul.f32 %v877, %v877
      %v1164 = vmul.f32 %v882, %v882
      %v1165 = vmul.f32 %v885, %v885
      %v1166 = vmul.f32 %v890, %v890
      %v1167 = vmul.f32 %v893, %v893
      %v1168 = vmul.f32 %v898, %v898
      %v1169 = vmul.f32 %v901, %v901
      %v1170 = vmul.f32 %v906, %v906
      %v1171 = vmul.f32 %v909, %v909
      %v1172 = vmul.f32 %v914, %v914
      %v1173 = vmul.f32 %v917, %v917
      %v1174 = vmul.f32 %v922, %v922
      %v1175 = vmul.f32 %v925, %v925
      %v1176 = vmul.f32 %v930, %v930
      %v1177 = vmul.f32 %v933, %v933
      %v1178 = vmul.f32 %v938, %v938
      %v1179 = vmul.f32 %v941, %v941
      %v1180 = vmul.f32 %v946, %v946
      %v1181 = vmul.f32 %v949, %v949
      %v1182 = vadd.f32 %v1150, %v1151
      %v1183 = vadd.f32 %v1182, %v1152
      %v1184 = vadd.f32 %v1183, %v1153
      %v1185 = vadd.f32 %v1184, %v1154
      %v1186 = vadd.f32 %v1185, %v1155
      %v1187 = vadd.f32 %v1186, %v1156
      %v1188 = vadd.f32 %v1187, %v1157
      %v1189 = vadd.f32 %v1188, %v1158
      %v1190 = vadd.f32 %v1189, %v1159
      %v1191 = vadd.f32 %v1190, %v1160
      %v1192 = vadd.f32 %v1191, %v1161
      %v1193 = vadd.f32 %v1192, %v1162
      %v1194 = vadd.f32 %v1193, %v1163
      %v1195 = vadd.f32 %v1194, %v1164
      %v1196 = vadd.f32 %v1195, %v1165
      %v1197 = vadd.f32 %v1196, %v1166
      %v1198 = vadd.f32 %v1197, %v1167
      %v1199 = vadd.f32 %v1198, %v1168
      %v1200 = vadd.f32 %v1199, %v1169
      %v1201 = vadd.f32 %v1200, %v1170
      %v1202 = vadd.f32 %v1201, %v1171
      %v1203 = vadd.f32 %v1202, %v1172
      %v1204 = vadd.f32 %v1203, %v1173
      %v1205 = vadd.f32 %v1204, %v1174
      %v1206 = vadd.f32 %v1205, %v1175
      %v1207 = vadd.f32 %v1206, %v1176
      %v1208 = vadd.f32 %v1207, %v1177
      %v1209 = vadd.f32 %v1208, %v1178
      %v1210 = vadd.f32 %v1209, %v1179
      %v1211 = vadd.f32 %v1210, %v1180
      %v1212 = vadd.f32 %v1211, %v1181
      %v1213 = vrot.slane %v1212, 4
      %v1214 = vadd.f32 %v1212, %v1213
      %v1215 = vrot.slane %v1214, 2
      %v1216 = vadd.f32 %v1214, %v1215
      %v1217 = vrot.slane %v1216, 1
      %v1218 = vadd.f32 %v1216, %v1217
      %1219 = vst [vmem:[%s260 + $0x1] sm:$0x1] %v1218
      %s1220 = smul.u32 32, %s17
      %p1221 = scmp.lt.s32.totalorder %s1220, 63
      %s1222 = scalar_select %p1221, %s1220, 63
      %s1223 = smul.addr %s1222, 4
      %s1224 = scalar_lea.vmem %s4, %s1223
      %p1225 = scmp.lt.s32.totalorder %s17, 1
      %s1226 = scalar_select %p1225, %s17, 1
      %s1227 = smul.addr %s1226, 8
      %s1228 = scalar_lea.vmem %s5, %s1227
      // Predicated region
      $region37: #{deconv_block_forward.6} parent=35 // pred_check
        %p1229 = pneg %p129
      $region38: #{deconv_block_forward.6} parent=35 // pred_check_branch
        %1231 = sbr.rel (%p1229) target = $region40
      $region39: #{deconv_block_forward.6} parent=35 // pred_region
        %s1232 = smul.u32 32, %s17
      $region40: #{deconv_block_forward.6} parent=35 // pred_fallthru
        _
      // Predicated region
      $region41: #{deconv_block_forward.6} parent=35 // pred_check
        %p1233 = pneg %p155
      $region42: #{deconv_block_forward.6} parent=35 // pred_check_branch
        %1235 = sbr.rel (%p1233) target = $region44
      $region43: #{deconv_block_forward.6} parent=35 // pred_region
        _
      $region44: #{deconv_block_forward.6} parent=35 // pred_fallthru
        _
    $region36: #{deconv_block_forward.6} parent=5 // pred_fallthru
      _
    %p1236 = scmp.le.s32.totalorder 2, %s12
    // Predicated region
    $region45: #{deconv_block_forward.6} parent=5 // pred_check
      %p1237 = pneg %p1236
    $region46: #{deconv_block_forward.6} parent=5 // pred_check_branch
      %1239 = sbr.rel (%p1237) target = $region48
    $region47: #{deconv_block_forward.6} parent=5 // pred_region
      %s1240 = ssub.s32 %s12, 2
      // Predicated region
      $region49: #{deconv_block_forward.6} parent=47 // pred_check
        %p1241 = pneg %p135
      $region50: #{deconv_block_forward.6} parent=47 // pred_check_branch
        %1243 = sbr.rel (%p1241) target = $region52
      $region51: #{deconv_block_forward.6} parent=47 // pred_region
        %s1244 = smul.u32 32, %s18
        %p1245 = scmp.lt.s32.totalorder %s1244, 63
        %s1246 = scalar_select %p1245, %s1244, 63
        %s1247 = smul.addr %s1246, 4
        %s1248 = scalar_lea.vmem %s4, %s1247
      $region52: #{deconv_block_forward.6} parent=47 // pred_fallthru
        _
      // Predicated region
      $region53: #{deconv_block_forward.6} parent=47 // pred_check
        %p1249 = pneg %p161
      $region54: #{deconv_block_forward.6} parent=47 // pred_check_branch
        %1251 = sbr.rel (%p1249) target = $region56
      $region55: #{deconv_block_forward.6} parent=47 // pred_region
        %p1252 = scmp.lt.s32.totalorder %s18, 1
        %s1253 = scalar_select %p1252, %s18, 1
        %s1254 = smul.addr %s1253, 8
        %s1255 = scalar_lea.vmem %s5, %s1254
      $region56: #{deconv_block_forward.6} parent=47 // pred_fallthru
        _
    $region48: #{deconv_block_forward.6} parent=5 // pred_fallthru
      _
  $region6: #{deconv_block_forward.6} parent=0 // loop_footer
    %s16 = sadd.s32 1, %s12
  $region7: #{deconv_block_forward.6} parent=0 // loop_footer_branch
    %11 = sbr.rel target = $region3
  $region8: #{deconv_block_forward.6} parent=0 // loop_exit
    _

// kernel: deconv_block_forward.7
$region0: #{deconv_block_forward.7}
  #allocation0 [shape = 'u32[]', space=smem, size = 0x4, offset = 0x4, fixed_abs, tag = 'smem constant byte address 0x4 - core index']
  #allocation1 [shape = 'u32[144,128]{1,0:T(1,128)}', space=vmem, size = 0x12000, scoped, tag = 'internal scratch']
  %s0 = inlined_call_operand.vmem [shape: bf16[512,128], index: 0, kind: input, shape index: {}]
  %s1 = inlined_call_operand.vmem [shape: f32[8,128], index: 1, kind: input, shape index: {}]
  %s2 = inlined_call_operand.vmem [shape: f32[512,128], index: 2, kind: output, shape index: {}]
  %s3 = sld [smem:[#allocation0]]
  $region41: #{deconv_block_forward.7} parent=0
    _
  %s5 = ssub.s32 1, %s3
  %s6 = scalar_select 0, %s5, %s3
  loop: start=0, step=1, limit=4
  $region2: #{deconv_block_forward.7} parent=0 // loop_pre_header
    _
  $region3: #{deconv_block_forward.7} parent=0 // loop_header
    %s8 = sphi 0, %s12
    %p9 = scmp.ge.s32.totalorder %s8, 4
    %s18 = sphi 0, %s20
    %s21 = sphi 0, %s18
    %s22 = sphi 0, %s21
    %s38 = sphi 0, %s22
    %s42 = sphi 0, %s42
    %s44 = sphi 0, %s42
    %s45 = sphi 0, %s44
    %s59 = sphi 0, %s45
    %s65 = sphi 0, %s67
    %s68 = sphi 0, %s65
    %s69 = sphi 0, %s68
    %s85 = sphi 0, %s69
  $region4: #{deconv_block_forward.7} parent=0 // loop_header_branch
    %11 = sbr.rel (%p9) target = $region8
  $region5: #{deconv_block_forward.7} parent=0 // loop_body
    %s13 = ssub.s32 %s8, 1
    %s14 = ssub.s32 %s8, 2
    %s15 = sadd.s32 %s8, 1
    %s16 = ssub.s32 %s8, %s15
    %p17 = scmp.eq.s32.totalorder %s16, 0
    %s19 = sadd.s32 %s18, 1
    %s20 = scalar_select %p17, %s18, %s19
    %p23 = pneg %p17
    %p24 = scmp.eq.s32.totalorder %s8, 1
    %p25 = por %p23, %p24
    %p26 = scmp.ne.s32.totalorder %s18, %s21
    %p27 = scmp.eq.s32.totalorder %s8, 0
    %p28 = por %p26, %p27
    %p29 = scmp.ne.s32.totalorder %s18, %s21
    %p30 = scmp.eq.s32.totalorder %s13, 1
    %p31 = por %p29, %p30
    %p32 = scmp.ne.s32.totalorder %s21, %s22
    %p33 = scmp.eq.s32.totalorder %s13, 0
    %p34 = por %p32, %p33
    %p35 = scmp.ne.s32.totalorder %s21, %s22
    %p36 = scmp.eq.s32.totalorder %s14, 1
    %p37 = por %p35, %p36
    %p39 = scmp.ne.s32.totalorder %s22, %s38
    %p40 = scmp.eq.s32.totalorder %s14, 0
    %p41 = por %p39, %p40
    %s43 = sadd.s32 %s42, 1
    %p46 = scmp.eq.s32.totalorder %s8, 1
    %p47 = scmp.ne.s32.totalorder %s42, %s44
    %p48 = scmp.eq.s32.totalorder %s8, 0
    %p49 = por %p47, %p48
    %p50 = scmp.ne.s32.totalorder %s42, %s44
    %p51 = scmp.eq.s32.totalorder %s13, 1
    %p52 = por %p50, %p51
    %p53 = scmp.ne.s32.totalorder %s44, %s45
    %p54 = scmp.eq.s32.totalorder %s13, 0
    %p55 = por %p53, %p54
    %p56 = scmp.ne.s32.totalorder %s44, %s45
    %p57 = scmp.eq.s32.totalorder %s14, 1
    %p58 = por %p56, %p57
    %p60 = scmp.ne.s32.totalorder %s45, %s59
    %p61 = scmp.eq.s32.totalorder %s14, 0
    %p62 = por %p60, %p61
    %s63 = ssub.s32 %s8, %s15
    %p64 = scmp.eq.s32.totalorder %s63, 0
    %s66 = sadd.s32 %s65, 1
    %s67 = scalar_select %p64, %s65, %s66
    %p70 = pneg %p64
    %p71 = scmp.eq.s32.totalorder %s8, 1
    %p72 = por %p70, %p71
    %p73 = scmp.ne.s32.totalorder %s65, %s68
    %p74 = scmp.eq.s32.totalorder %s8, 0
    %p75 = por %p73, %p74
    %p76 = scmp.ne.s32.totalorder %s65, %s68
    %p77 = scmp.eq.s32.totalorder %s13, 1
    %p78 = por %p76, %p77
    %p79 = scmp.ne.s32.totalorder %s68, %s69
    %p80 = scmp.eq.s32.totalorder %s13, 0
    %p81 = por %p79, %p80
    %p82 = scmp.ne.s32.totalorder %s68, %s69
    %p83 = scmp.eq.s32.totalorder %s14, 1
    %p84 = por %p82, %p83
    %p86 = scmp.ne.s32.totalorder %s69, %s85
    %p87 = scmp.eq.s32.totalorder %s14, 0
    %p88 = por %p86, %p87
    %p89 = scmp.le.s32.totalorder 1, %s8
    %p90 = scmp.lt.s32.totalorder %s8, 3
    %p91 = pnand %p89, %p90
    %p92 = pneg %p91
    // Predicated region
    $region9: #{deconv_block_forward.7} parent=5 // pred_check
      _
    $region10: #{deconv_block_forward.7} parent=5 // pred_check_branch
      %94 = sbr.rel (%p91) target = $region12
    $region11: #{deconv_block_forward.7} parent=5 // pred_region
      %s95 = ssub.s32 %s8, 1
      // Predicated region
      $region13: #{deconv_block_forward.7} parent=11 // pred_check
        %p96 = pneg %p55
      $region14: #{deconv_block_forward.7} parent=11 // pred_check_branch
        %98 = sbr.rel (%p96) target = $region16
      $region15: #{deconv_block_forward.7} parent=11 // pred_region
        _
      $region16: #{deconv_block_forward.7} parent=11 // pred_fallthru
        _
    $region12: #{deconv_block_forward.7} parent=5 // pred_fallthru
      _
    %p99 = scmp.lt.s32.totalorder %s8, 2
    // Predicated region
    $region17: #{deconv_block_forward.7} parent=5 // pred_check
      %p100 = pneg %p99
    $region18: #{deconv_block_forward.7} parent=5 // pred_check_branch
      %102 = sbr.rel (%p100) target = $region20
    $region19: #{deconv_block_forward.7} parent=5 // pred_region
      // Predicated region
      $region21: #{deconv_block_forward.7} parent=19 // pred_check
        %p103 = pneg %p28
      $region22: #{deconv_block_forward.7} parent=19 // pred_check_branch
        %105 = sbr.rel (%p103) target = $region24
      $region23: #{deconv_block_forward.7} parent=19 // pred_region
        %s106 = smul.u32 32, %s8
        %p107 = scmp.lt.s32.totalorder %s106, 63
        %s108 = scalar_select %p107, %s106, 63
        %s109 = smul.addr %s108, 4
        %s110 = scalar_lea.vmem %s0, %s109
        %s111 = smul.u32 32, %s8
      $region24: #{deconv_block_forward.7} parent=19 // pred_fallthru
        _
    $region20: #{deconv_block_forward.7} parent=5 // pred_fallthru
      _
    %p112 = scmp.le.s32.totalorder 1, %s8
    %p113 = scmp.lt.s32.totalorder %s8, 3
    %p114 = pnand %p112, %p113
    %p115 = pneg %p114
    // Predicated region
    $region25: #{deconv_block_forward.7} parent=5 // pred_check
      _
    $region26: #{deconv_block_forward.7} parent=5 // pred_check_branch
      %117 = sbr.rel (%p114) target = $region28
    $region27: #{deconv_block_forward.7} parent=5 // pred_region
      %s118 = ssub.s32 %s8, 1
      %s119 = smul.u32 32, %s13
      %p120 = scmp.lt.s32.totalorder %s119, 63
      %s121 = scalar_select %p120, %s119, 63
      %s122 = smul.addr %s121, 4
      %s123 = scalar_lea.vmem %s0, %s122
      %p124 = pneg %p34
      %p125 = pneg %p31
      %p126 = pneg %p55
      %p127 = pneg %p52
      %p128 = pneg %p81
      %p129 = pneg %p78
      %s130 = smul.u32 32, %s13
      %p131 = scmp.lt.s32.totalorder %s130, 63
      %s132 = scalar_select %p131, %s130, 63
      %s133 = smul.addr %s132, 8
      %s134 = scalar_lea.vmem %s2, %s133
      %s135 = smul.u32 32, %s13
      %p136 = scmp.lt.s32.totalorder %s135, 63
      %s137 = scalar_select %p136, %s135, 63
      %s138 = smul.addr %s137, 4
      %s139 = scalar_lea.vmem %s0, %s138
      %s140 = smul.u32 32, %s13
      %s141 = smul.u32 32, %s13
      %p142 = scmp.lt.s32.totalorder %s141, 63
      %s143 = scalar_select %p142, %s141, 63
      %s144 = smul.addr %s143, 8
      %s145 = scalar_lea.vmem %s2, %s144
      %s146 = smul.u32 32, %s13
      %v147 = vld [vmem:[%s139] sm:$0xf]
      %v148 = vld [vmem:[%s139 + $0x4] sm:$0xf]
      %v149 = vld [vmem:[%s139 + $0x8] sm:$0xf]
      %v150 = vld [vmem:[%s139 + $0xc] sm:$0xf]
      %v151 = vld [vmem:[%s139 + $0x10] sm:$0xf]
      %v152 = vld [vmem:[%s139 + $0x14] sm:$0xf]
      %v153 = vld [vmem:[%s139 + $0x18] sm:$0xf]
      %v154 = vld [vmem:[%s139 + $0x1c] sm:$0xf]
      %v155 = vld [vmem:[%s139 + $0x20] sm:$0xf]
      %v156 = vld [vmem:[%s139 + $0x24] sm:$0xf]
      %v157 = vld [vmem:[%s139 + $0x28] sm:$0xf]
      %v158 = vld [vmem:[%s139 + $0x2c] sm:$0xf]
      %v159 = vld [vmem:[%s139 + $0x30] sm:$0xf]
      %v160 = vld [vmem:[%s139 + $0x34] sm:$0xf]
      %v161 = vld [vmem:[%s139 + $0x38] sm:$0xf]
      %v162 = vld [vmem:[%s139 + $0x3c] sm:$0xf]
      %v163 = vld [vmem:[%s139 + $0x40] sm:$0xf]
      %v164 = vld [vmem:[%s139 + $0x44] sm:$0xf]
      %v165 = vld [vmem:[%s139 + $0x48] sm:$0xf]
      %v166 = vld [vmem:[%s139 + $0x4c] sm:$0xf]
      %v167 = vld [vmem:[%s139 + $0x50] sm:$0xf]
      %v168 = vld [vmem:[%s139 + $0x54] sm:$0xf]
      %v169 = vld [vmem:[%s139 + $0x58] sm:$0xf]
      %v170 = vld [vmem:[%s139 + $0x5c] sm:$0xf]
      %v171 = vld [vmem:[%s139 + $0x60] sm:$0xf]
      %v172 = vld [vmem:[%s139 + $0x64] sm:$0xf]
      %v173 = vld [vmem:[%s139 + $0x68] sm:$0xf]
      %v174 = vld [vmem:[%s139 + $0x6c] sm:$0xf]
      %v175 = vld [vmem:[%s139 + $0x70] sm:$0xf]
      %v176 = vld [vmem:[%s139 + $0x74] sm:$0xf]
      %v177 = vld [vmem:[%s139 + $0x78] sm:$0xf]
      %v178 = vld [vmem:[%s139 + $0x7c] sm:$0xf]
      %v179 = vunpack.c.l.bf16 %v147
      %v180 = vunpack.c.l.bf16 %v148
      %v181 = vunpack.c.l.bf16 %v149
      %v182 = vunpack.c.l.bf16 %v150
      %v183 = vunpack.c.l.bf16 %v151
      %v184 = vunpack.c.l.bf16 %v152
      %v185 = vunpack.c.l.bf16 %v153
      %v186 = vunpack.c.l.bf16 %v154
      %v187 = vunpack.c.l.bf16 %v155
      %v188 = vunpack.c.l.bf16 %v156
      %v189 = vunpack.c.l.bf16 %v157
      %v190 = vunpack.c.l.bf16 %v158
      %v191 = vunpack.c.l.bf16 %v159
      %v192 = vunpack.c.l.bf16 %v160
      %v193 = vunpack.c.l.bf16 %v161
      %v194 = vunpack.c.l.bf16 %v162
      %v195 = vunpack.c.l.bf16 %v163
      %v196 = vunpack.c.l.bf16 %v164
      %v197 = vunpack.c.l.bf16 %v165
      %v198 = vunpack.c.l.bf16 %v166
      %v199 = vunpack.c.l.bf16 %v167
      %v200 = vunpack.c.l.bf16 %v168
      %v201 = vunpack.c.l.bf16 %v169
      %v202 = vunpack.c.l.bf16 %v170
      %v203 = vunpack.c.l.bf16 %v171
      %v204 = vunpack.c.l.bf16 %v172
      %v205 = vunpack.c.l.bf16 %v173
      %v206 = vunpack.c.l.bf16 %v174
      %v207 = vunpack.c.l.bf16 %v175
      %v208 = vunpack.c.l.bf16 %v176
      %v209 = vunpack.c.l.bf16 %v177
      %v210 = vunpack.c.l.bf16 %v178
      %v211 = vld [vmem:[%s1] sm:$0x1]
      %v212 = vlaneseq
      %v213 = vshrl.u32 %v212, 7
      %v214 = vsub.s32 0, %v213
      %v215 = vrot.slane %v211, %v214
      %v216 = vmul.f32 %v179, %v215
      %v217 = vmul.f32 %v180, %v215
      %v218 = vmul.f32 %v181, %v215
      %v219 = vmul.f32 %v182, %v215
      %v220 = vmul.f32 %v183, %v215
      %v221 = vmul.f32 %v184, %v215
      %v222 = vmul.f32 %v185, %v215
      %v223 = vmul.f32 %v186, %v215
      %v224 = vmul.f32 %v187, %v215
      %v225 = vmul.f32 %v188, %v215
      %v226 = vmul.f32 %v189, %v215
      %v227 = vmul.f32 %v190, %v215
      %v228 = vmul.f32 %v191, %v215
      %v229 = vmul.f32 %v192, %v215
      %v230 = vmul.f32 %v193, %v215
      %v231 = vmul.f32 %v194, %v215
      %v232 = vmul.f32 %v195, %v215
      %v233 = vmul.f32 %v196, %v215
      %v234 = vmul.f32 %v197, %v215
      %v235 = vmul.f32 %v198, %v215
      %v236 = vmul.f32 %v199, %v215
      %v237 = vmul.f32 %v200, %v215
      %v238 = vmul.f32 %v201, %v215
      %v239 = vmul.f32 %v202, %v215
      %v240 = vmul.f32 %v203, %v215
      %v241 = vmul.f32 %v204, %v215
      %v242 = vmul.f32 %v205, %v215
      %v243 = vmul.f32 %v206, %v215
      %v244 = vmul.f32 %v207, %v215
      %v245 = vmul.f32 %v208, %v215
      %v246 = vmul.f32 %v209, %v215
      %v247 = vmul.f32 %v210, %v215
      %v248 = vld [vmem:[%s1 + $0x1] sm:$0x1]
      %v249 = vlaneseq
      %v250 = vshrl.u32 %v249, 7
      %v251 = vsub.s32 0, %v250
      %v252 = vrot.slane %v248, %v251
      %v253 = vadd.f32 %v216, %v252
      %v254 = vadd.f32 %v217, %v252
      %v255 = vadd.f32 %v218, %v252
      %v256 = vadd.f32 %v219, %v252
      %v257 = vadd.f32 %v220, %v252
      %v258 = vadd.f32 %v221, %v252
      %v259 = vadd.f32 %v222, %v252
      %v260 = vadd.f32 %v223, %v252
      %v261 = vadd.f32 %v224, %v252
      %v262 = vadd.f32 %v225, %v252
      %v263 = vadd.f32 %v226, %v252
      %v264 = vadd.f32 %v227, %v252
      %v265 = vadd.f32 %v228, %v252
      %v266 = vadd.f32 %v229, %v252
      %v267 = vadd.f32 %v230, %v252
      %v268 = vadd.f32 %v231, %v252
      %v269 = vadd.f32 %v232, %v252
      %v270 = vadd.f32 %v233, %v252
      %v271 = vadd.f32 %v234, %v252
      %v272 = vadd.f32 %v235, %v252
      %v273 = vadd.f32 %v236, %v252
      %v274 = vadd.f32 %v237, %v252
      %v275 = vadd.f32 %v238, %v252
      %v276 = vadd.f32 %v239, %v252
      %v277 = vadd.f32 %v240, %v252
      %v278 = vadd.f32 %v241, %v252
      %v279 = vadd.f32 %v242, %v252
      %v280 = vadd.f32 %v243, %v252
      %v281 = vadd.f32 %v244, %v252
      %v282 = vadd.f32 %v245, %v252
      %v283 = vadd.f32 %v246, %v252
      %v284 = vadd.f32 %v247, %v252
      %vm285 = vcmp.ge.f32.partialorder %v253, 0.0
      %vm286 = vcmp.ge.f32.partialorder %v254, 0.0
      %vm287 = vcmp.ge.f32.partialorder %v255, 0.0
      %vm288 = vcmp.ge.f32.partialorder %v256, 0.0
      %vm289 = vcmp.ge.f32.partialorder %v257, 0.0
      %vm290 = vcmp.ge.f32.partialorder %v258, 0.0
      %vm291 = vcmp.ge.f32.partialorder %v259, 0.0
      %vm292 = vcmp.ge.f32.partialorder %v260, 0.0
      %vm293 = vcmp.ge.f32.partialorder %v261, 0.0
      %vm294 = vcmp.ge.f32.partialorder %v262, 0.0
      %vm295 = vcmp.ge.f32.partialorder %v263, 0.0
      %vm296 = vcmp.ge.f32.partialorder %v264, 0.0
      %vm297 = vcmp.ge.f32.partialorder %v265, 0.0
      %vm298 = vcmp.ge.f32.partialorder %v266, 0.0
      %vm299 = vcmp.ge.f32.partialorder %v267, 0.0
      %vm300 = vcmp.ge.f32.partialorder %v268, 0.0
      %vm301 = vcmp.ge.f32.partialorder %v269, 0.0
      %vm302 = vcmp.ge.f32.partialorder %v270, 0.0
      %vm303 = vcmp.ge.f32.partialorder %v271, 0.0
      %vm304 = vcmp.ge.f32.partialorder %v272, 0.0
      %vm305 = vcmp.ge.f32.partialorder %v273, 0.0
      %vm306 = vcmp.ge.f32.partialorder %v274, 0.0
      %vm307 = vcmp.ge.f32.partialorder %v275, 0.0
      %vm308 = vcmp.ge.f32.partialorder %v276, 0.0
      %vm309 = vcmp.ge.f32.partialorder %v277, 0.0
      %vm310 = vcmp.ge.f32.partialorder %v278, 0.0
      %vm311 = vcmp.ge.f32.partialorder %v279, 0.0
      %vm312 = vcmp.ge.f32.partialorder %v280, 0.0
      %vm313 = vcmp.ge.f32.partialorder %v281, 0.0
      %vm314 = vcmp.ge.f32.partialorder %v282, 0.0
      %vm315 = vcmp.ge.f32.partialorder %v283, 0.0
      %vm316 = vcmp.ge.f32.partialorder %v284, 0.0
      %v317 = vld [vmem:[%s1 + $0x2] sm:$0x1]
      %v318 = vlaneseq
      %v319 = vshrl.u32 %v318, 7
      %v320 = vsub.s32 0, %v319
      %v321 = vrot.slane %v317, %v320
      %v322 = vmul.f32 %v321, %v253
      %v323 = vmul.f32 %v321, %v254
      %v324 = vmul.f32 %v321, %v255
      %v325 = vmul.f32 %v321, %v256
      %v326 = vmul.f32 %v321, %v257
      %v327 = vmul.f32 %v321, %v258
      %v328 = vmul.f32 %v321, %v259
      %v329 = vmul.f32 %v321, %v260
      %v330 = vmul.f32 %v321, %v261
      %v331 = vmul.f32 %v321, %v262
      %v332 = vmul.f32 %v321, %v263
      %v333 = vmul.f32 %v321, %v264
      %v334 = vmul.f32 %v321, %v265
      %v335 = vmul.f32 %v321, %v266
      %v336 = vmul.f32 %v321, %v267
      %v337 = vmul.f32 %v321, %v268
      %v338 = vmul.f32 %v321, %v269
      %v339 = vmul.f32 %v321, %v270
      %v340 = vmul.f32 %v321, %v271
      %v341 = vmul.f32 %v321, %v272
      %v342 = vmul.f32 %v321, %v273
      %v343 = vmul.f32 %v321, %v274
      %v344 = vmul.f32 %v321, %v275
      %v345 = vmul.f32 %v321, %v276
      %v346 = vmul.f32 %v321, %v277
      %v347 = vmul.f32 %v321, %v278
      %v348 = vmul.f32 %v321, %v279
      %v349 = vmul.f32 %v321, %v280
      %v350 = vmul.f32 %v321, %v281
      %v351 = vmul.f32 %v321, %v282
      %v352 = vmul.f32 %v321, %v283
      %v353 = vmul.f32 %v321, %v284
      %v354 = vsel %vm285, %v253, %v322
      %v355 = vsel %vm286, %v254, %v323
      %v356 = vsel %vm287, %v255, %v324
      %v357 = vsel %vm288, %v256, %v325
      %v358 = vsel %vm289, %v257, %v326
      %v359 = vsel %vm290, %v258, %v327
      %v360 = vsel %vm291, %v259, %v328
      %v361 = vsel %vm292, %v260, %v329
      %v362 = vsel %vm293, %v261, %v330
      %v363 = vsel %vm294, %v262, %v331
      %v364 = vsel %vm295, %v263, %v332
      %v365 = vsel %vm296, %v264, %v333
      %v366 = vsel %vm297, %v265, %v334
      %v367 = vsel %vm298, %v266, %v335
      %v368 = vsel %vm299, %v267, %v336
      %v369 = vsel %vm300, %v268, %v337
      %v370 = vsel %vm301, %v269, %v338
      %v371 = vsel %vm302, %v270, %v339
      %v372 = vsel %vm303, %v271, %v340
      %v373 = vsel %vm304, %v272, %v341
      %v374 = vsel %vm305, %v273, %v342
      %v375 = vsel %vm306, %v274, %v343
      %v376 = vsel %vm307, %v275, %v344
      %v377 = vsel %vm308, %v276, %v345
      %v378 = vsel %vm309, %v277, %v346
      %v379 = vsel %vm310, %v278, %v347
      %v380 = vsel %vm311, %v279, %v348
      %v381 = vsel %vm312, %v280, %v349
      %v382 = vsel %vm313, %v281, %v350
      %v383 = vsel %vm314, %v282, %v351
      %v384 = vsel %vm315, %v283, %v352
      %v385 = vsel %vm316, %v284, %v353
      %386 = vst [vmem:[%s145] sm:$0xff] %v354
      %387 = vst [vmem:[%s145 + $0x8] sm:$0xff] %v355
      %388 = vst [vmem:[%s145 + $0x10] sm:$0xff] %v356
      %389 = vst [vmem:[%s145 + $0x18] sm:$0xff] %v357
      %390 = vst [vmem:[%s145 + $0x20] sm:$0xff] %v358
      %391 = vst [vmem:[%s145 + $0x28] sm:$0xff] %v359
      %392 = vst [vmem:[%s145 + $0x30] sm:$0xff] %v360
      %393 = vst [vmem:[%s145 + $0x38] sm:$0xff] %v361
      %394 = vst [vmem:[%s145 + $0x40] sm:$0xff] %v362
      %395 = vst [vmem:[%s145 + $0x48] sm:$0xff] %v363
      %396 = vst [vmem:[%s145 + $0x50] sm:$0xff] %v364
      %397 = vst [vmem:[%s145 + $0x58] sm:$0xff] %v365
      %398 = vst [vmem:[%s145 + $0x60] sm:$0xff] %v366
      %399 = vst [vmem:[%s145 + $0x68] sm:$0xff] %v367
      %400 = vst [vmem:[%s145 + $0x70] sm:$0xff] %v368
      %401 = vst [vmem:[%s145 + $0x78] sm:$0xff] %v369
      %402 = vst [vmem:[%s145 + $0x80] sm:$0xff] %v370
      %403 = vst [vmem:[%s145 + $0x88] sm:$0xff] %v371
      %404 = vst [vmem:[%s145 + $0x90] sm:$0xff] %v372
      %405 = vst [vmem:[%s145 + $0x98] sm:$0xff] %v373
      %406 = vst [vmem:[%s145 + $0xa0] sm:$0xff] %v374
      %407 = vst [vmem:[%s145 + $0xa8] sm:$0xff] %v375
      %408 = vst [vmem:[%s145 + $0xb0] sm:$0xff] %v376
      %409 = vst [vmem:[%s145 + $0xb8] sm:$0xff] %v377
      %410 = vst [vmem:[%s145 + $0xc0] sm:$0xff] %v378
      %411 = vst [vmem:[%s145 + $0xc8] sm:$0xff] %v379
      %412 = vst [vmem:[%s145 + $0xd0] sm:$0xff] %v380
      %413 = vst [vmem:[%s145 + $0xd8] sm:$0xff] %v381
      %414 = vst [vmem:[%s145 + $0xe0] sm:$0xff] %v382
      %415 = vst [vmem:[%s145 + $0xe8] sm:$0xff] %v383
      %416 = vst [vmem:[%s145 + $0xf0] sm:$0xff] %v384
      %417 = vst [vmem:[%s145 + $0xf8] sm:$0xff] %v385
      %s418 = smul.u32 32, %s13
      %p419 = scmp.lt.s32.totalorder %s418, 63
      %s420 = scalar_select %p419, %s418, 63
      %s421 = smul.addr %s420, 8
      %s422 = scalar_lea.vmem %s2, %s421
      // Predicated region
      $region29: #{deconv_block_forward.7} parent=27 // pred_check
        %p423 = pneg %p78
      $region30: #{deconv_block_forward.7} parent=27 // pred_check_branch
        %425 = sbr.rel (%p423) target = $region32
      $region31: #{deconv_block_forward.7} parent=27 // pred_region
        %s426 = smul.u32 32, %s13
      $region32: #{deconv_block_forward.7} parent=27 // pred_fallthru
        _
    $region28: #{deconv_block_forward.7} parent=5 // pred_fallthru
      _
    %p427 = scmp.le.s32.totalorder 2, %s8
    // Predicated region
    $region33: #{deconv_block_forward.7} parent=5 // pred_check
      %p428 = pneg %p427
    $region34: #{deconv_block_forward.7} parent=5 // pred_check_branch
      %430 = sbr.rel (%p428) target = $region36
    $region35: #{deconv_block_forward.7} parent=5 // pred_region
      %s431 = ssub.s32 %s8, 2
      // Predicated region
      $region37: #{deconv_block_forward.7} parent=35 // pred_check
        %p432 = pneg %p84
      $region38: #{deconv_block_forward.7} parent=35 // pred_check_branch
        %434 = sbr.rel (%p432) target = $region40
      $region39: #{deconv_block_forward.7} parent=35 // pred_region
        %s435 = smul.u32 32, %s14
        %p436 = scmp.lt.s32.totalorder %s435, 63
        %s437 = scalar_select %p436, %s435, 63
        %s438 = smul.addr %s437, 8
        %s439 = scalar_lea.vmem %s2, %s438
      $region40: #{deconv_block_forward.7} parent=35 // pred_fallthru
        _
    $region36: #{deconv_block_forward.7} parent=5 // pred_fallthru
      _
  $region6: #{deconv_block_forward.7} parent=0 // loop_footer
    %s12 = sadd.s32 1, %s8
  $region7: #{deconv_block_forward.7} parent=0 // loop_footer_branch
    %7 = sbr.rel target = $region3
  $region8: #{deconv_block_forward.7} parent=0 // loop_exit
    _

</llo_original>
